<compile_context>
chip_gen: v5e
topology: v5e:2x2
jax: 0.10.0
libtpu: 0.0.40
codegen_flags: <defaults>
</compile_context>

<pallas_src>
import jax
import jax.numpy as jnp
from jax.experimental import pallas as pl
from jax.experimental.pallas import tpu as pltpu

N_ACTIONS = 5
D_STATE = 256            # each of state_emb / next_state_emb
D_IN = 2 * D_STATE       # 512 after concat
D_H1 = 1024
D_H2 = 256
D_OUT_PAD = 128          # lane-dense padded output width (n_actions <= 128)

B_TILE_MAX = 1024        # 1024-row tile: h1 live value = 4 MiB f32, well in budget


def _round_up(x, m):
    return ((x + m - 1) // m) * m


def _mlp_kernel(s_ref, n_ref,
                w1_ref, b1_ref,
                w2_ref, b2_ref,
                w3_ref, b3_ref,
                out_ref):
    # bf16 activations into the MXU, f32 accumulation.  Inputs are expected to
    # already be bf16 (producer-side); the astype below is a trace-time no-op
    # then, and only kicks in for f32 callers.
    s = s_ref[...]
    n = n_ref[...]
    if s.dtype != jnp.bfloat16:
        s = s.astype(jnp.bfloat16)
    if n.dtype != jnp.bfloat16:
        n = n.astype(jnp.bfloat16)

    # Linear(512 -> 1024) on cat([s, n], -1) without a lane-dim concat:
    #   [s | n] @ W1 == s @ W1[:256] + n @ W1[256:]
    # Static Ref slices (256 is a multiple of 8) are free.
    h1 = jnp.dot(s, w1_ref[:D_STATE, :], preferred_element_type=jnp.float32)
    h1 = h1 + jnp.dot(n, w1_ref[D_STATE:, :],
                      preferred_element_type=jnp.float32)
    h1 = jnp.maximum(h1 + b1_ref[...], 0.0)
    # TODO(synk): Dropout(p=0.1) is identity in eval mode; training-mode dropout
    # would need pltpu.prng_seed / pltpu.prng_random_bits masking.

    h2 = jnp.dot(h1.astype(jnp.bfloat16), w2_ref[...],
                 preferred_element_type=jnp.float32)
    h2 = jnp.maximum(h2 + b2_ref[...], 0.0)

    out = jnp.dot(h2.astype(jnp.bfloat16), w3_ref[...],
                  preferred_element_type=jnp.float32)
    out_ref[...] = (out + b3_ref[...]).astype(out_ref.dtype)


def init_params(key, n_actions=N_ACTIONS):
    """Weights in bf16 (kernel-streaming / MXU-input dtype), biases in f32,
    w3/b3 zero-padded out to D_OUT_PAD lanes for lane-dense output stores."""
    ks = jax.random.split(key, 6)
    scale = 0.02
    w1 = scale * jax.random.normal(ks[0], (D_IN, D_H1), jnp.float32)
    b1 = scale * jax.random.normal(ks[1], (D_H1,), jnp.float32)
    w2 = scale * jax.random.normal(ks[2], (D_H1, D_H2), jnp.float32)
    b2 = scale * jax.random.normal(ks[3], (D_H2,), jnp.float32)
    w3 = scale * jax.random.normal(ks[4], (D_H2, n_actions), jnp.float32)
    b3 = scale * jax.random.normal(ks[5], (n_actions,), jnp.float32)

    w3_pad = jnp.zeros((D_H2, D_OUT_PAD), jnp.float32).at[:, :n_actions].set(w3)
    b3_pad = jnp.zeros((D_OUT_PAD,), jnp.float32).at[:n_actions].set(b3)

    return {
        "n_actions": n_actions,
        "w1": w1.astype(jnp.bfloat16),            # (512, 1024)
        "b1": b1[None, :],                        # (1, 1024) f32
        "w2": w2.astype(jnp.bfloat16),            # (1024, 256)
        "b2": b2[None, :],                        # (1, 256) f32
        "w3": w3_pad.astype(jnp.bfloat16),        # (256, 128) zero-padded
        "b3": b3_pad[None, :],                    # (1, 128) f32 zero-padded
    }


def _pick_tiling(B):
    """Batch tiling with bounded padding and >= 2 grid steps when possible.

    - Pad the batch only to a multiple of 8 (sublane) plus < 8 rows per step,
      never up to the next multiple of the tile (old logic padded B=520 -> 1024).
    - Force n_steps >= 2 once B >= 16 so the "parallel" grid axis can be
      sharded across both v7x TensorCores.
    """
    b_pad8 = _round_up(max(B, 1), 8)
    n_steps = pl.cdiv(b_pad8, B_TILE_MAX)
    if b_pad8 >= 16:
        n_steps = max(n_steps, 2)
    b_tile = _round_up(pl.cdiv(b_pad8, n_steps), 8)     # <= B_TILE_MAX
    b_pad = n_steps * b_tile                            # pad bounded by <8*n_steps rows
    return b_tile, b_pad, n_steps


def action_predictor_wstate(state_emb, next_state_emb, params):
    B = state_emb.shape[0]
    n_actions = params["n_actions"]

    b_tile, b_pad, n_steps = _pick_tiling(B)
    if b_pad != B:
        pad = ((0, b_pad - B), (0, 0))
        state_emb = jnp.pad(state_emb, pad)
        next_state_emb = jnp.pad(next_state_emb, pad)

    act_bytes = jnp.dtype(state_emb.dtype).itemsize

    # Weights/biases: constant index_map -> fetched once, VMEM-resident;
    # single-buffered so the pipeline doesn't keep a useless second copy.
    w_once = pl.Buffered(1)

    in_specs = [
        # Batch-tiled activations (pipelined / double-buffered over the grid).
        pl.BlockSpec((b_tile, D_STATE), lambda i: (i, 0)),
        pl.BlockSpec((b_tile, D_STATE), lambda i: (i, 0)),
        # Weights / biases.
        pl.BlockSpec((D_IN, D_H1), lambda i: (0, 0), pipeline_mode=w_once),
        pl.BlockSpec((1, D_H1), lambda i: (0, 0), pipeline_mode=w_once),
        pl.BlockSpec((D_H1, D_H2), lambda i: (0, 0), pipeline_mode=w_once),
        pl.BlockSpec((1, D_H2), lambda i: (0, 0), pipeline_mode=w_once),
        pl.BlockSpec((D_H2, D_OUT_PAD), lambda i: (0, 0), pipeline_mode=w_once),
        pl.BlockSpec((1, D_OUT_PAD), lambda i: (0, 0), pipeline_mode=w_once),
    ]
    out_spec = pl.BlockSpec((b_tile, D_OUT_PAD), lambda i: (i, 0))

    flops = 2 * b_pad * (D_IN * D_H1 + D_H1 * D_H2 + D_H2 * D_OUT_PAD)
    bytes_accessed = (
        2 * b_pad * D_STATE * act_bytes                          # s, n inputs
        + (D_IN * D_H1 + D_H1 * D_H2 + D_H2 * D_OUT_PAD) * 2     # bf16 weights
        + (D_H1 + D_H2 + D_OUT_PAD) * 4                          # f32 biases
        + b_pad * D_OUT_PAD * 2                                  # bf16 output
    )

    out = pl.pallas_call(
        _mlp_kernel,
        out_shape=jax.ShapeDtypeStruct((b_pad, D_OUT_PAD), jnp.bfloat16),
        grid=(n_steps,),
        in_specs=in_specs,
        out_specs=out_spec,
        compiler_params=pltpu.CompilerParams(
            dimension_semantics=("parallel",),
            vmem_limit_bytes=48 << 20,
        ),
        cost_estimate=pl.CostEstimate(
            flops=flops, transcendentals=0, bytes_accessed=bytes_accessed),
    )(state_emb, next_state_emb,
      params["w1"], params["b1"],
      params["w2"], params["b2"],
      params["w3"], params["b3"])

    # Slice off padded rows / padded action columns outside the kernel.
    return out[:B, :n_actions]


def _reference(state_emb, next_state_emb, params):
    """Pure-JAX reference matching the kernel's bf16-input / f32-accumulate /
    bf16-output rounding."""
    n_actions = params["n_actions"]
    x = jnp.concatenate([state_emb, next_state_emb], axis=-1).astype(jnp.bfloat16)
    h1 = jnp.dot(x, params["w1"], preferred_element_type=jnp.float32)
    h1 = jnp.maximum(h1 + params["b1"], 0.0)
    h2 = jnp.dot(h1.astype(jnp.bfloat16), params["w2"],
                 preferred_element_type=jnp.float32)
    h2 = jnp.maximum(h2 + params["b2"], 0.0)
    out = jnp.dot(h2.astype(jnp.bfloat16), params["w3"],
                  preferred_element_type=jnp.float32) + params["b3"]
    return out.astype(jnp.bfloat16)[:, :n_actions]


if __name__ == "__main__":
    key = jax.random.PRNGKey(0)
    k_params, k_s, k_n = jax.random.split(key, 3)

    params = init_params(k_params)
    B = 8
    # Producer emits bf16 activations (see perf notes) — no wrapper-side cast.
    state_emb = jax.random.normal(k_s, (B, D_STATE), jnp.float32).astype(jnp.bfloat16)
    next_state_emb = jax.random.normal(k_n, (B, D_STATE), jnp.float32).astype(jnp.bfloat16)

    out = action_predictor_wstate(state_emb, next_state_emb, params)
    out = jax.block_until_ready(out)

    ref = _reference(state_emb, next_state_emb, params)
    assert out.shape == (B, N_ACTIONS), out.shape
    # bf16 matmul inputs / bf16 output -> tolerances loosened vs pure-f32.
    diff = jnp.max(jnp.abs(out.astype(jnp.float32) - ref.astype(jnp.float32)))
    assert jnp.allclose(out.astype(jnp.float32), ref.astype(jnp.float32),
                        atol=2e-2, rtol=2e-2), float(diff)

    print("KERNEL_OK")
</pallas_src>

<mosaic_0001>
module attributes {stable_mosaic.version = 11 : i64} {
  func.func @_mlp_kernel(%arg0: i32, %arg1: memref<8x256xbf16, #tpu.memory_space<vmem>>, %arg2: memref<8x256xbf16, #tpu.memory_space<vmem>>, %arg3: memref<512x1024xbf16, #tpu.memory_space<vmem>>, %arg4: memref<1x1024xf32, #tpu.memory_space<vmem>>, %arg5: memref<1024x256xbf16, #tpu.memory_space<vmem>>, %arg6: memref<1x256xf32, #tpu.memory_space<vmem>>, %arg7: memref<256x128xbf16, #tpu.memory_space<vmem>>, %arg8: memref<1x128xf32, #tpu.memory_space<vmem>>, %arg9: memref<8x128xbf16, #tpu.memory_space<vmem>>) attributes {dimension_semantics = [#tpu.dimension_semantics<parallel>], iteration_bounds = array<i64: 1>, scalar_prefetch = 0 : i64, scratch_operands = 0 : i64, tpu.core_type = #tpu.core_type<tc>, window_params = [{transform_indices = @transform_0, window_bounds = array<i64: 8, 256>}, {transform_indices = @transform_1, window_bounds = array<i64: 8, 256>}, {pipeline_mode = #tpu.pipeline_mode<synchronous>, transform_indices = @transform_2, window_bounds = array<i64: 512, 1024>}, {pipeline_mode = #tpu.pipeline_mode<synchronous>, transform_indices = @transform_3, window_bounds = array<i64: 1, 1024>}, {pipeline_mode = #tpu.pipeline_mode<synchronous>, transform_indices = @transform_4, window_bounds = array<i64: 1024, 256>}, {pipeline_mode = #tpu.pipeline_mode<synchronous>, transform_indices = @transform_5, window_bounds = array<i64: 1, 256>}, {pipeline_mode = #tpu.pipeline_mode<synchronous>, transform_indices = @transform_6, window_bounds = array<i64: 256, 128>}, {pipeline_mode = #tpu.pipeline_mode<synchronous>, transform_indices = @transform_7, window_bounds = array<i64: 1, 128>}, {transform_indices = @transform_8, window_bounds = array<i64: 8, 128>}]} {
    %c0 = arith.constant 0 : index
    %c0_0 = arith.constant 0 : index
    %0 = vector.load %arg1[%c0, %c0_0] : memref<8x256xbf16, #tpu.memory_space<vmem>>, vector<8x256xbf16>
    %c0_1 = arith.constant 0 : index
    %c0_2 = arith.constant 0 : index
    %1 = vector.load %arg2[%c0_1, %c0_2] : memref<8x256xbf16, #tpu.memory_space<vmem>>, vector<8x256xbf16>
    %c0_3 = arith.constant 0 : index
    %c0_4 = arith.constant 0 : index
    %2 = vector.load %arg3[%c0_3, %c0_4] : memref<512x1024xbf16, #tpu.memory_space<vmem>>, vector<256x1024xbf16>
    %cst = arith.constant dense<0.000000e+00> : vector<8x1024xf32>
    %3 = tpu.matmul %0, %2, %cst {dimension_numbers = #tpu.dot_dimension_numbers<[1], [0], [0], [1], [0, 0, 1, 1], [], []>} : vector<8x256xbf16>, vector<256x1024xbf16>, vector<8x1024xf32> -> vector<8x1024xf32>
    %c256 = arith.constant 256 : index
    %c0_5 = arith.constant 0 : index
    %4 = vector.load %arg3[%c256, %c0_5] : memref<512x1024xbf16, #tpu.memory_space<vmem>>, vector<256x1024xbf16>
    %cst_6 = arith.constant dense<0.000000e+00> : vector<8x1024xf32>
    %5 = tpu.matmul %1, %4, %cst_6 {dimension_numbers = #tpu.dot_dimension_numbers<[1], [0], [0], [1], [0, 0, 1, 1], [], []>} : vector<8x256xbf16>, vector<256x1024xbf16>, vector<8x1024xf32> -> vector<8x1024xf32>
    %6 = arith.addf %3, %5 : vector<8x1024xf32>
    %c0_7 = arith.constant 0 : index
    %c0_8 = arith.constant 0 : index
    %7 = vector.load %arg4[%c0_7, %c0_8] : memref<1x1024xf32, #tpu.memory_space<vmem>>, vector<1x1024xf32>
    %8 = vector.broadcast %7 : vector<1x1024xf32> to vector<8x1024xf32>
    %9 = arith.addf %6, %8 : vector<8x1024xf32>
    %cst_9 = arith.constant 0.000000e+00 : f32
    %10 = vector.broadcast %cst_9 : f32 to vector<8x1024xf32>
    %11 = arith.maximumf %9, %10 : vector<8x1024xf32>
    %12 = arith.truncf %11 : vector<8x1024xf32> to vector<8x1024xbf16>
    %c0_10 = arith.constant 0 : index
    %c0_11 = arith.constant 0 : index
    %13 = vector.load %arg5[%c0_10, %c0_11] : memref<1024x256xbf16, #tpu.memory_space<vmem>>, vector<1024x256xbf16>
    %cst_12 = arith.constant dense<0.000000e+00> : vector<8x256xf32>
    %14 = tpu.matmul %12, %13, %cst_12 {dimension_numbers = #tpu.dot_dimension_numbers<[1], [0], [0], [1], [0, 0, 1, 1], [], []>} : vector<8x1024xbf16>, vector<1024x256xbf16>, vector<8x256xf32> -> vector<8x256xf32>
    %c0_13 = arith.constant 0 : index
    %c0_14 = arith.constant 0 : index
    %15 = vector.load %arg6[%c0_13, %c0_14] : memref<1x256xf32, #tpu.memory_space<vmem>>, vector<1x256xf32>
    %16 = vector.broadcast %15 : vector<1x256xf32> to vector<8x256xf32>
    %17 = arith.addf %14, %16 : vector<8x256xf32>
    %cst_15 = arith.constant 0.000000e+00 : f32
    %18 = vector.broadcast %cst_15 : f32 to vector<8x256xf32>
    %19 = arith.maximumf %17, %18 : vector<8x256xf32>
    %20 = arith.truncf %19 : vector<8x256xf32> to vector<8x256xbf16>
    %c0_16 = arith.constant 0 : index
    %c0_17 = arith.constant 0 : index
    %21 = vector.load %arg7[%c0_16, %c0_17] : memref<256x128xbf16, #tpu.memory_space<vmem>>, vector<256x128xbf16>
    %cst_18 = arith.constant dense<0.000000e+00> : vector<8x128xf32>
    %22 = tpu.matmul %20, %21, %cst_18 {dimension_numbers = #tpu.dot_dimension_numbers<[1], [0], [0], [1], [0, 0, 1, 1], [], []>} : vector<8x256xbf16>, vector<256x128xbf16>, vector<8x128xf32> -> vector<8x128xf32>
    %c0_19 = arith.constant 0 : index
    %c0_20 = arith.constant 0 : index
    %23 = vector.load %arg8[%c0_19, %c0_20] : memref<1x128xf32, #tpu.memory_space<vmem>>, vector<1x128xf32>
    %24 = vector.broadcast %23 : vector<1x128xf32> to vector<8x128xf32>
    %25 = arith.addf %22, %24 : vector<8x128xf32>
    %26 = arith.truncf %25 : vector<8x128xf32> to vector<8x128xbf16>
    %c0_21 = arith.constant 0 : index
    %c0_22 = arith.constant 0 : index
    %27 = vector.load %arg9[%c0_21, %c0_22] : memref<8x128xbf16, #tpu.memory_space<vmem>>, vector<8x128xbf16>
    tpu.vector_store %arg9[%c0_21, %c0_22], %26 {strides = array<i32>} : memref<8x128xbf16, #tpu.memory_space<vmem>>, vector<8x128xbf16>,
    return
  }
  func.func @transform_0(%arg0: i32) -> (i32, i32) {
    %c0_i32 = arith.constant 0 : i32
    %c0_i32_0 = arith.constant 0 : i32
    return %arg0, %c0_i32 : i32, i32
  }
  func.func @transform_1(%arg0: i32) -> (i32, i32) {
    %c0_i32 = arith.constant 0 : i32
    %c0_i32_0 = arith.constant 0 : i32
    return %arg0, %c0_i32 : i32, i32
  }
  func.func @transform_2(%arg0: i32) -> (i32, i32) {
    %c0_i32 = arith.constant 0 : i32
    %c0_i32_0 = arith.constant 0 : i32
    %c0_i32_1 = arith.constant 0 : i32
    return %c0_i32, %c0_i32_0 : i32, i32
  }
  func.func @transform_3(%arg0: i32) -> (i32, i32) {
    %c0_i32 = arith.constant 0 : i32
    %c0_i32_0 = arith.constant 0 : i32
    %c0_i32_1 = arith.constant 0 : i32
    return %c0_i32, %c0_i32_0 : i32, i32
  }
  func.func @transform_4(%arg0: i32) -> (i32, i32) {
    %c0_i32 = arith.constant 0 : i32
    %c0_i32_0 = arith.constant 0 : i32
    %c0_i32_1 = arith.constant 0 : i32
    return %c0_i32, %c0_i32_0 : i32, i32
  }
  func.func @transform_5(%arg0: i32) -> (i32, i32) {
    %c0_i32 = arith.constant 0 : i32
    %c0_i32_0 = arith.constant 0 : i32
    %c0_i32_1 = arith.constant 0 : i32
    return %c0_i32, %c0_i32_0 : i32, i32
  }
  func.func @transform_6(%arg0: i32) -> (i32, i32) {
    %c0_i32 = arith.constant 0 : i32
    %c0_i32_0 = arith.constant 0 : i32
    %c0_i32_1 = arith.constant 0 : i32
    return %c0_i32, %c0_i32_0 : i32, i32
  }
  func.func @transform_7(%arg0: i32) -> (i32, i32) {
    %c0_i32 = arith.constant 0 : i32
    %c0_i32_0 = arith.constant 0 : i32
    %c0_i32_1 = arith.constant 0 : i32
    return %c0_i32, %c0_i32_0 : i32, i32
  }
  func.func @transform_8(%arg0: i32) -> (i32, i32) {
    %c0_i32 = arith.constant 0 : i32
    %c0_i32_0 = arith.constant 0 : i32
    return %arg0, %c0_i32 : i32, i32
  }
}

</mosaic_0001>

<llo_original>
// kernel: tpu_custom_call.1
$region0: #{tpu_custom_call.1}
  #allocation0 [shape = 'u32[]', space=smem, size = 0x4, offset = 0x4, fixed_abs, tag = 'smem constant byte address 0x4 - core index']
  #allocation1 [shape = 'u32[72,128]{1,0:T(1,128)}', space=vmem, size = 0x9000, scoped, tag = 'internal scratch']
  %s0 = inlined_call_operand.hbm [shape: bf16[8,256], index: 0, kind: input, shape index: {}]
  %s1 = inlined_call_operand.hbm [shape: bf16[8,256], index: 1, kind: input, shape index: {}]
  %s2 = inlined_call_operand.hbm [shape: bf16[512,1024], index: 2, kind: input, shape index: {}]
  %s3 = inlined_call_operand.hbm [shape: f32[1,1024], index: 3, kind: input, shape index: {}]
  %s4 = inlined_call_operand.hbm [shape: bf16[1024,256], index: 4, kind: input, shape index: {}]
  %s5 = inlined_call_operand.vmem [shape: f32[1,256], index: 5, kind: input, shape index: {}]
  %s6 = inlined_call_operand.hbm [shape: bf16[256,128], index: 6, kind: input, shape index: {}]
  %s7 = inlined_call_operand.vmem [shape: f32[1,128], index: 7, kind: input, shape index: {}]
  %s8 = inlined_call_operand.hbm [shape: bf16[8,128], index: 8, kind: output, shape index: {}]
  %s9 = sld [smem:[#allocation0]]
  $region66: #{tpu_custom_call.1} parent=0
    _
  %s11 = ssub.s32 1, %s9
  %s12 = scalar_select 0, %s11, %s9
  $region1: #{tpu_custom_call.1} parent=0
    #allocation2 [shape = 'u8[4096]{0}', space=vmem, size = 0x1000, scoped, tag = 'input window, operand 0, single buffered']
    #allocation3 [shape = 's32[1]{0}', space=sflag, size = 0x4, scoped, tag = 'scoped memory for tpu_custom_call.1']
    #allocation4 [shape = 's32[1]{0}', space=sflag, size = 0x4, scoped, tag = 'scoped memory for tpu_custom_call.1']
    #allocation5 [shape = 'u8[4096]{0}', space=vmem, size = 0x1000, scoped, tag = 'input window, operand 1, single buffered']
    #allocation6 [shape = 's32[1]{0}', space=sflag, size = 0x4, scoped, tag = 'scoped memory for tpu_custom_call.1']
    #allocation7 [shape = 'u8[1048576]{0}', space=vmem, size = 0x100000, scoped, tag = 'input window, operand 2, single buffered']
    #allocation8 [shape = 'u8[4096]{0}', space=vmem, size = 0x1000, scoped, tag = 'input window, operand 3, single buffered']
    #allocation9 [shape = 's32[1]{0}', space=sflag, size = 0x4, scoped, tag = 'scoped memory for tpu_custom_call.1']
    #allocation10 [shape = 'u8[524288]{0}', space=vmem, size = 0x80000, scoped, tag = 'input window, operand 4, single buffered']
    #allocation11 [shape = 'u8[65536]{0}', space=vmem, size = 0x10000, scoped, tag = 'input window, operand 6, single buffered']
    #allocation12 [shape = 's32[1]{0}', space=sflag, size = 0x4, scoped, tag = 'scoped memory for tpu_custom_call.1']
    #allocation13 [shape = 'u8[2048]{0}', space=vmem, size = 0x800, scoped, tag = 'output window, operand 0, single buffered']
    %13 = vsyncpa [#allocation3], 0
    %14 = vsyncpa [#allocation6], 0
    %15 = vsyncpa [#allocation9], 0
    %16 = vsyncpa [#allocation12], 0
    %17 = vsyncpa [#allocation4], 0
    // Predicated region
    $region2: #{tpu_custom_call.1} parent=1 // pred_check
      _
    $region3: #{tpu_custom_call.1} parent=1 // pred_check_branch
      %19 = sbr.rel (0) target = $region5
    $region4: #{tpu_custom_call.1} parent=1 // pred_region
      %21 = vsyncadd [#allocation3], 0
      %s23 = sshll.u32 %s0, 4
      %s24 = int_to_ptr.hbm [resolvable:$true] %s23
      %s25 = sshll.u32 [#allocation2], 4
      %s26 = int_to_ptr.vmem [resolvable:$true] %s25
      %28 = dma.hbm_to_vmem [thread:$0]  %s24, 128, %s26, [#allocation3]
    $region5: #{tpu_custom_call.1} parent=1 // pred_fallthru
      _
    // Predicated region
    $region6: #{tpu_custom_call.1} parent=1 // pred_check
      _
    $region7: #{tpu_custom_call.1} parent=1 // pred_check_branch
      %30 = sbr.rel (0) target = $region9
    $region8: #{tpu_custom_call.1} parent=1 // pred_region
      %32 = vsyncadd [#allocation6], 0
      %s34 = sshll.u32 %s1, 4
      %s35 = int_to_ptr.hbm [resolvable:$true] %s34
      %s36 = sshll.u32 [#allocation5], 4
      %s37 = int_to_ptr.vmem [resolvable:$true] %s36
      %39 = dma.hbm_to_vmem [thread:$0]  %s35, 128, %s37, [#allocation6]
    $region9: #{tpu_custom_call.1} parent=1 // pred_fallthru
      _
    // Predicated region
    $region10: #{tpu_custom_call.1} parent=1 // pred_check
      _
    $region11: #{tpu_custom_call.1} parent=1 // pred_check_branch
      %41 = sbr.rel (0) target = $region13
    $region12: #{tpu_custom_call.1} parent=1 // pred_region
      %43 = vsyncadd [#allocation6], 0
      %s44 = sshll.u32 %s2, 4
      %s45 = int_to_ptr.hbm [resolvable:$true] %s44
      %s46 = sshll.u32 [#allocation7], 4
      %s47 = int_to_ptr.vmem [resolvable:$true] %s46
      %52 = dma.hbm_to_vmem [thread:$0]  %s45, 32768, %s47, [#allocation6], 512, 512, 32
    $region13: #{tpu_custom_call.1} parent=1 // pred_fallthru
      _
    // Predicated region
    $region14: #{tpu_custom_call.1} parent=1 // pred_check
      _
    $region15: #{tpu_custom_call.1} parent=1 // pred_check_branch
      %54 = sbr.rel (0) target = $region17
    $region16: #{tpu_custom_call.1} parent=1 // pred_region
      %56 = vsyncadd [#allocation9], 0
      %s58 = sshll.u32 %s3, 4
      %s59 = int_to_ptr.hbm [resolvable:$true] %s58
      %s60 = sshll.u32 [#allocation8], 4
      %s61 = int_to_ptr.vmem [resolvable:$true] %s60
      %63 = dma.hbm_to_vmem [thread:$0]  %s59, 128, %s61, [#allocation9]
    $region17: #{tpu_custom_call.1} parent=1 // pred_fallthru
      _
    // Predicated region
    $region18: #{tpu_custom_call.1} parent=1 // pred_check
      _
    $region19: #{tpu_custom_call.1} parent=1 // pred_check_branch
      %65 = sbr.rel (0) target = $region21
    $region20: #{tpu_custom_call.1} parent=1 // pred_region
      %67 = vsyncadd [#allocation9], 0
      %s68 = sshll.u32 %s4, 4
      %s69 = int_to_ptr.hbm [resolvable:$true] %s68
      %s70 = sshll.u32 [#allocation10], 4
      %s71 = int_to_ptr.vmem [resolvable:$true] %s70
      %76 = dma.hbm_to_vmem [thread:$0]  %s69, 16384, %s71, [#allocation9], 128, 128, 8
    $region21: #{tpu_custom_call.1} parent=1 // pred_fallthru
      _
    // Predicated region
    $region22: #{tpu_custom_call.1} parent=1 // pred_check
      _
    $region23: #{tpu_custom_call.1} parent=1 // pred_check_branch
      %78 = sbr.rel (0) target = $region25
    $region24: #{tpu_custom_call.1} parent=1 // pred_region
      _
    $region25: #{tpu_custom_call.1} parent=1 // pred_fallthru
      _
    // Predicated region
    $region26: #{tpu_custom_call.1} parent=1 // pred_check
      _
    $region27: #{tpu_custom_call.1} parent=1 // pred_check_branch
      %80 = sbr.rel (0) target = $region29
    $region28: #{tpu_custom_call.1} parent=1 // pred_region
      %82 = vsyncadd [#allocation12], 0
      %s83 = sshll.u32 %s6, 4
      %s84 = int_to_ptr.hbm [resolvable:$true] %s83
      %s85 = sshll.u32 [#allocation11], 4
      %s86 = int_to_ptr.vmem [resolvable:$true] %s85
      %91 = dma.hbm_to_vmem [thread:$0]  %s84, 2048, %s86, [#allocation12], 64, 64, 4
    $region29: #{tpu_custom_call.1} parent=1 // pred_fallthru
      _
    // Predicated region
    $region30: #{tpu_custom_call.1} parent=1 // pred_check
      _
    $region31: #{tpu_custom_call.1} parent=1 // pred_check_branch
      %93 = sbr.rel (0) target = $region33
    $region32: #{tpu_custom_call.1} parent=1 // pred_region
      _
    $region33: #{tpu_custom_call.1} parent=1 // pred_fallthru
      _
    // Predicated region
    $region34: #{tpu_custom_call.1} parent=1 // pred_check
      _
    $region35: #{tpu_custom_call.1} parent=1 // pred_check_branch
      %95 = sbr.rel (0) target = $region37
    $region36: #{tpu_custom_call.1} parent=1 // pred_region
      %97 = dma.done [#allocation3], 128
    $region37: #{tpu_custom_call.1} parent=1 // pred_fallthru
      _
    // Predicated region
    $region38: #{tpu_custom_call.1} parent=1 // pred_check
      _
    $region39: #{tpu_custom_call.1} parent=1 // pred_check_branch
      %99 = sbr.rel (0) target = $region41
    $region40: #{tpu_custom_call.1} parent=1 // pred_region
      %101 = dma.done [#allocation6], 128
    $region41: #{tpu_custom_call.1} parent=1 // pred_fallthru
      _
    // Predicated region
    $region42: #{tpu_custom_call.1} parent=1 // pred_check
      _
    $region43: #{tpu_custom_call.1} parent=1 // pred_check_branch
      %103 = sbr.rel (0) target = $region45
    $region44: #{tpu_custom_call.1} parent=1 // pred_region
      %105 = dma.done [#allocation6], 32768
    $region45: #{tpu_custom_call.1} parent=1 // pred_fallthru
      _
    // Predicated region
    $region46: #{tpu_custom_call.1} parent=1 // pred_check
      _
    $region47: #{tpu_custom_call.1} parent=1 // pred_check_branch
      %107 = sbr.rel (0) target = $region49
    $region48: #{tpu_custom_call.1} parent=1 // pred_region
      %109 = dma.done [#allocation9], 128
    $region49: #{tpu_custom_call.1} parent=1 // pred_fallthru
      _
    // Predicated region
    $region50: #{tpu_custom_call.1} parent=1 // pred_check
      _
    $region51: #{tpu_custom_call.1} parent=1 // pred_check_branch
      %111 = sbr.rel (0) target = $region53
    $region52: #{tpu_custom_call.1} parent=1 // pred_region
      %113 = dma.done [#allocation9], 16384
    $region53: #{tpu_custom_call.1} parent=1 // pred_fallthru
      _
    // Predicated region
    $region54: #{tpu_custom_call.1} parent=1 // pred_check
      _
    $region55: #{tpu_custom_call.1} parent=1 // pred_check_branch
      %115 = sbr.rel (0) target = $region57
    $region56: #{tpu_custom_call.1} parent=1 // pred_region
      %117 = dma.done [#allocation12], 2048
    $region57: #{tpu_custom_call.1} parent=1 // pred_fallthru
      _
    %v118 = vld [vmem:[#allocation2] sm:$0xff]
    %v119 = vld [vmem:[#allocation5] sm:$0xff]
    %v120 = vld [vmem:[#allocation7] sm:$0xff]
    %v121 = vld [vmem:[#allocation7 + $0x8] sm:$0xff]
    %v122 = vld [vmem:[#allocation7 + $0x10] sm:$0xff]
    %v123 = vld [vmem:[#allocation7 + $0x18] sm:$0xff]
    %v124 = vld [vmem:[#allocation7 + $0x20] sm:$0xff]
    %v125 = vld [vmem:[#allocation7 + $0x28] sm:$0xff]
    %v126 = vld [vmem:[#allocation7 + $0x30] sm:$0xff]
    %v127 = vld [vmem:[#allocation7 + $0x38] sm:$0xff]
    %v128 = vld [vmem:[#allocation7 + $0x40] sm:$0xff]
    %v129 = vld [vmem:[#allocation7 + $0x48] sm:$0xff]
    %v130 = vld [vmem:[#allocation7 + $0x50] sm:$0xff]
    %v131 = vld [vmem:[#allocation7 + $0x58] sm:$0xff]
    %v132 = vld [vmem:[#allocation7 + $0x60] sm:$0xff]
    %v133 = vld [vmem:[#allocation7 + $0x68] sm:$0xff]
    %v134 = vld [vmem:[#allocation7 + $0x70] sm:$0xff]
    %v135 = vld [vmem:[#allocation7 + $0x78] sm:$0xff]
    %v136 = vld [vmem:[#allocation7 + $0x80] sm:$0xff]
    %v137 = vld [vmem:[#allocation7 + $0x88] sm:$0xff]
    %v138 = vld [vmem:[#allocation7 + $0x90] sm:$0xff]
    %v139 = vld [vmem:[#allocation7 + $0x98] sm:$0xff]
    %v140 = vld [vmem:[#allocation7 + $0xa0] sm:$0xff]
    %v141 = vld [vmem:[#allocation7 + $0xa8] sm:$0xff]
    %v142 = vld [vmem:[#allocation7 + $0xb0] sm:$0xff]
    %v143 = vld [vmem:[#allocation7 + $0xb8] sm:$0xff]
    %v144 = vld [vmem:[#allocation7 + $0xc0] sm:$0xff]
    %v145 = vld [vmem:[#allocation7 + $0xc8] sm:$0xff]
    %v146 = vld [vmem:[#allocation7 + $0xd0] sm:$0xff]
    %v147 = vld [vmem:[#allocation7 + $0xd8] sm:$0xff]
    %v148 = vld [vmem:[#allocation7 + $0xe0] sm:$0xff]
    %v149 = vld [vmem:[#allocation7 + $0xe8] sm:$0xff]
    %v150 = vld [vmem:[#allocation7 + $0xf0] sm:$0xff]
    %v151 = vld [vmem:[#allocation7 + $0xf8] sm:$0xff]
    %v152 = vld [vmem:[#allocation7 + $0x100] sm:$0xff]
    %v153 = vld [vmem:[#allocation7 + $0x108] sm:$0xff]
    %v154 = vld [vmem:[#allocation7 + $0x110] sm:$0xff]
    %v155 = vld [vmem:[#allocation7 + $0x118] sm:$0xff]
    %v156 = vld [vmem:[#allocation7 + $0x120] sm:$0xff]
    %v157 = vld [vmem:[#allocation7 + $0x128] sm:$0xff]
    %v158 = vld [vmem:[#allocation7 + $0x130] sm:$0xff]
    %v159 = vld [vmem:[#allocation7 + $0x138] sm:$0xff]
    %v160 = vld [vmem:[#allocation7 + $0x140] sm:$0xff]
    %v161 = vld [vmem:[#allocation7 + $0x148] sm:$0xff]
    %v162 = vld [vmem:[#allocation7 + $0x150] sm:$0xff]
    %v163 = vld [vmem:[#allocation7 + $0x158] sm:$0xff]
    %v164 = vld [vmem:[#allocation7 + $0x160] sm:$0xff]
    %v165 = vld [vmem:[#allocation7 + $0x168] sm:$0xff]
    %v166 = vld [vmem:[#allocation7 + $0x170] sm:$0xff]
    %v167 = vld [vmem:[#allocation7 + $0x178] sm:$0xff]
    %v168 = vld [vmem:[#allocation7 + $0x180] sm:$0xff]
    %v169 = vld [vmem:[#allocation7 + $0x188] sm:$0xff]
    %v170 = vld [vmem:[#allocation7 + $0x190] sm:$0xff]
    %v171 = vld [vmem:[#allocation7 + $0x198] sm:$0xff]
    %v172 = vld [vmem:[#allocation7 + $0x1a0] sm:$0xff]
    %v173 = vld [vmem:[#allocation7 + $0x1a8] sm:$0xff]
    %v174 = vld [vmem:[#allocation7 + $0x1b0] sm:$0xff]
    %v175 = vld [vmem:[#allocation7 + $0x1b8] sm:$0xff]
    %v176 = vld [vmem:[#allocation7 + $0x1c0] sm:$0xff]
    %v177 = vld [vmem:[#allocation7 + $0x1c8] sm:$0xff]
    %v178 = vld [vmem:[#allocation7 + $0x1d0] sm:$0xff]
    %v179 = vld [vmem:[#allocation7 + $0x1d8] sm:$0xff]
    %v180 = vld [vmem:[#allocation7 + $0x1e0] sm:$0xff]
    %v181 = vld [vmem:[#allocation7 + $0x1e8] sm:$0xff]
    %v182 = vld [vmem:[#allocation7 + $0x1f0] sm:$0xff]
    %v183 = vld [vmem:[#allocation7 + $0x1f8] sm:$0xff]
    %v184 = vld [vmem:[#allocation7 + $0x200] sm:$0xff]
    %v185 = vld [vmem:[#allocation7 + $0x208] sm:$0xff]
    %v186 = vld [vmem:[#allocation7 + $0x210] sm:$0xff]
    %v187 = vld [vmem:[#allocation7 + $0x218] sm:$0xff]
    %v188 = vld [vmem:[#allocation7 + $0x220] sm:$0xff]
    %v189 = vld [vmem:[#allocation7 + $0x228] sm:$0xff]
    %v190 = vld [vmem:[#allocation7 + $0x230] sm:$0xff]
    %v191 = vld [vmem:[#allocation7 + $0x238] sm:$0xff]
    %v192 = vld [vmem:[#allocation7 + $0x240] sm:$0xff]
    %v193 = vld [vmem:[#allocation7 + $0x248] sm:$0xff]
    %v194 = vld [vmem:[#allocation7 + $0x250] sm:$0xff]
    %v195 = vld [vmem:[#allocation7 + $0x258] sm:$0xff]
    %v196 = vld [vmem:[#allocation7 + $0x260] sm:$0xff]
    %v197 = vld [vmem:[#allocation7 + $0x268] sm:$0xff]
    %v198 = vld [vmem:[#allocation7 + $0x270] sm:$0xff]
    %v199 = vld [vmem:[#allocation7 + $0x278] sm:$0xff]
    %v200 = vld [vmem:[#allocation7 + $0x280] sm:$0xff]
    %v201 = vld [vmem:[#allocation7 + $0x288] sm:$0xff]
    %v202 = vld [vmem:[#allocation7 + $0x290] sm:$0xff]
    %v203 = vld [vmem:[#allocation7 + $0x298] sm:$0xff]
    %v204 = vld [vmem:[#allocation7 + $0x2a0] sm:$0xff]
    %v205 = vld [vmem:[#allocation7 + $0x2a8] sm:$0xff]
    %v206 = vld [vmem:[#allocation7 + $0x2b0] sm:$0xff]
    %v207 = vld [vmem:[#allocation7 + $0x2b8] sm:$0xff]
    %v208 = vld [vmem:[#allocation7 + $0x2c0] sm:$0xff]
    %v209 = vld [vmem:[#allocation7 + $0x2c8] sm:$0xff]
    %v210 = vld [vmem:[#allocation7 + $0x2d0] sm:$0xff]
    %v211 = vld [vmem:[#allocation7 + $0x2d8] sm:$0xff]
    %v212 = vld [vmem:[#allocation7 + $0x2e0] sm:$0xff]
    %v213 = vld [vmem:[#allocation7 + $0x2e8] sm:$0xff]
    %v214 = vld [vmem:[#allocation7 + $0x2f0] sm:$0xff]
    %v215 = vld [vmem:[#allocation7 + $0x2f8] sm:$0xff]
    %v216 = vld [vmem:[#allocation7 + $0x300] sm:$0xff]
    %v217 = vld [vmem:[#allocation7 + $0x308] sm:$0xff]
    %v218 = vld [vmem:[#allocation7 + $0x310] sm:$0xff]
    %v219 = vld [vmem:[#allocation7 + $0x318] sm:$0xff]
    %v220 = vld [vmem:[#allocation7 + $0x320] sm:$0xff]
    %v221 = vld [vmem:[#allocation7 + $0x328] sm:$0xff]
    %v222 = vld [vmem:[#allocation7 + $0x330] sm:$0xff]
    %v223 = vld [vmem:[#allocation7 + $0x338] sm:$0xff]
    %v224 = vld [vmem:[#allocation7 + $0x340] sm:$0xff]
    %v225 = vld [vmem:[#allocation7 + $0x348] sm:$0xff]
    %v226 = vld [vmem:[#allocation7 + $0x350] sm:$0xff]
    %v227 = vld [vmem:[#allocation7 + $0x358] sm:$0xff]
    %v228 = vld [vmem:[#allocation7 + $0x360] sm:$0xff]
    %v229 = vld [vmem:[#allocation7 + $0x368] sm:$0xff]
    %v230 = vld [vmem:[#allocation7 + $0x370] sm:$0xff]
    %v231 = vld [vmem:[#allocation7 + $0x378] sm:$0xff]
    %v232 = vld [vmem:[#allocation7 + $0x380] sm:$0xff]
    %v233 = vld [vmem:[#allocation7 + $0x388] sm:$0xff]
    %v234 = vld [vmem:[#allocation7 + $0x390] sm:$0xff]
    %v235 = vld [vmem:[#allocation7 + $0x398] sm:$0xff]
    %v236 = vld [vmem:[#allocation7 + $0x3a0] sm:$0xff]
    %v237 = vld [vmem:[#allocation7 + $0x3a8] sm:$0xff]
    %v238 = vld [vmem:[#allocation7 + $0x3b0] sm:$0xff]
    %v239 = vld [vmem:[#allocation7 + $0x3b8] sm:$0xff]
    %v240 = vld [vmem:[#allocation7 + $0x3c0] sm:$0xff]
    %v241 = vld [vmem:[#allocation7 + $0x3c8] sm:$0xff]
    %v242 = vld [vmem:[#allocation7 + $0x3d0] sm:$0xff]
    %v243 = vld [vmem:[#allocation7 + $0x3d8] sm:$0xff]
    %v244 = vld [vmem:[#allocation7 + $0x3e0] sm:$0xff]
    %v245 = vld [vmem:[#allocation7 + $0x3e8] sm:$0xff]
    %v246 = vld [vmem:[#allocation7 + $0x3f0] sm:$0xff]
    %v247 = vld [vmem:[#allocation7 + $0x3f8] sm:$0xff]
    %v248 = vld [vmem:[#allocation7 + $0x400] sm:$0xff]
    %v249 = vld [vmem:[#allocation7 + $0x408] sm:$0xff]
    %v250 = vld [vmem:[#allocation7 + $0x410] sm:$0xff]
    %v251 = vld [vmem:[#allocation7 + $0x418] sm:$0xff]
    %v252 = vld [vmem:[#allocation7 + $0x420] sm:$0xff]
    %v253 = vld [vmem:[#allocation7 + $0x428] sm:$0xff]
    %v254 = vld [vmem:[#allocation7 + $0x430] sm:$0xff]
    %v255 = vld [vmem:[#allocation7 + $0x438] sm:$0xff]
    %v256 = vld [vmem:[#allocation7 + $0x440] sm:$0xff]
    %v257 = vld [vmem:[#allocation7 + $0x448] sm:$0xff]
    %v258 = vld [vmem:[#allocation7 + $0x450] sm:$0xff]
    %v259 = vld [vmem:[#allocation7 + $0x458] sm:$0xff]
    %v260 = vld [vmem:[#allocation7 + $0x460] sm:$0xff]
    %v261 = vld [vmem:[#allocation7 + $0x468] sm:$0xff]
    %v262 = vld [vmem:[#allocation7 + $0x470] sm:$0xff]
    %v263 = vld [vmem:[#allocation7 + $0x478] sm:$0xff]
    %v264 = vld [vmem:[#allocation7 + $0x480] sm:$0xff]
    %v265 = vld [vmem:[#allocation7 + $0x488] sm:$0xff]
    %v266 = vld [vmem:[#allocation7 + $0x490] sm:$0xff]
    %v267 = vld [vmem:[#allocation7 + $0x498] sm:$0xff]
    %v268 = vld [vmem:[#allocation7 + $0x4a0] sm:$0xff]
    %v269 = vld [vmem:[#allocation7 + $0x4a8] sm:$0xff]
    %v270 = vld [vmem:[#allocation7 + $0x4b0] sm:$0xff]
    %v271 = vld [vmem:[#allocation7 + $0x4b8] sm:$0xff]
    %v272 = vld [vmem:[#allocation7 + $0x4c0] sm:$0xff]
    %v273 = vld [vmem:[#allocation7 + $0x4c8] sm:$0xff]
    %v274 = vld [vmem:[#allocation7 + $0x4d0] sm:$0xff]
    %v275 = vld [vmem:[#allocation7 + $0x4d8] sm:$0xff]
    %v276 = vld [vmem:[#allocation7 + $0x4e0] sm:$0xff]
    %v277 = vld [vmem:[#allocation7 + $0x4e8] sm:$0xff]
    %v278 = vld [vmem:[#allocation7 + $0x4f0] sm:$0xff]
    %v279 = vld [vmem:[#allocation7 + $0x4f8] sm:$0xff]
    %v280 = vld [vmem:[#allocation7 + $0x500] sm:$0xff]
    %v281 = vld [vmem:[#allocation7 + $0x508] sm:$0xff]
    %v282 = vld [vmem:[#allocation7 + $0x510] sm:$0xff]
    %v283 = vld [vmem:[#allocation7 + $0x518] sm:$0xff]
    %v284 = vld [vmem:[#allocation7 + $0x520] sm:$0xff]
    %v285 = vld [vmem:[#allocation7 + $0x528] sm:$0xff]
    %v286 = vld [vmem:[#allocation7 + $0x530] sm:$0xff]
    %v287 = vld [vmem:[#allocation7 + $0x538] sm:$0xff]
    %v288 = vld [vmem:[#allocation7 + $0x540] sm:$0xff]
    %v289 = vld [vmem:[#allocation7 + $0x548] sm:$0xff]
    %v290 = vld [vmem:[#allocation7 + $0x550] sm:$0xff]
    %v291 = vld [vmem:[#allocation7 + $0x558] sm:$0xff]
    %v292 = vld [vmem:[#allocation7 + $0x560] sm:$0xff]
    %v293 = vld [vmem:[#allocation7 + $0x568] sm:$0xff]
    %v294 = vld [vmem:[#allocation7 + $0x570] sm:$0xff]
    %v295 = vld [vmem:[#allocation7 + $0x578] sm:$0xff]
    %v296 = vld [vmem:[#allocation7 + $0x580] sm:$0xff]
    %v297 = vld [vmem:[#allocation7 + $0x588] sm:$0xff]
    %v298 = vld [vmem:[#allocation7 + $0x590] sm:$0xff]
    %v299 = vld [vmem:[#allocation7 + $0x598] sm:$0xff]
    %v300 = vld [vmem:[#allocation7 + $0x5a0] sm:$0xff]
    %v301 = vld [vmem:[#allocation7 + $0x5a8] sm:$0xff]
    %v302 = vld [vmem:[#allocation7 + $0x5b0] sm:$0xff]
    %v303 = vld [vmem:[#allocation7 + $0x5b8] sm:$0xff]
    %v304 = vld [vmem:[#allocation7 + $0x5c0] sm:$0xff]
    %v305 = vld [vmem:[#allocation7 + $0x5c8] sm:$0xff]
    %v306 = vld [vmem:[#allocation7 + $0x5d0] sm:$0xff]
    %v307 = vld [vmem:[#allocation7 + $0x5d8] sm:$0xff]
    %v308 = vld [vmem:[#allocation7 + $0x5e0] sm:$0xff]
    %v309 = vld [vmem:[#allocation7 + $0x5e8] sm:$0xff]
    %v310 = vld [vmem:[#allocation7 + $0x5f0] sm:$0xff]
    %v311 = vld [vmem:[#allocation7 + $0x5f8] sm:$0xff]
    %v312 = vld [vmem:[#allocation7 + $0x600] sm:$0xff]
    %v313 = vld [vmem:[#allocation7 + $0x608] sm:$0xff]
    %v314 = vld [vmem:[#allocation7 + $0x610] sm:$0xff]
    %v315 = vld [vmem:[#allocation7 + $0x618] sm:$0xff]
    %v316 = vld [vmem:[#allocation7 + $0x620] sm:$0xff]
    %v317 = vld [vmem:[#allocation7 + $0x628] sm:$0xff]
    %v318 = vld [vmem:[#allocation7 + $0x630] sm:$0xff]
    %v319 = vld [vmem:[#allocation7 + $0x638] sm:$0xff]
    %v320 = vld [vmem:[#allocation7 + $0x640] sm:$0xff]
    %v321 = vld [vmem:[#allocation7 + $0x648] sm:$0xff]
    %v322 = vld [vmem:[#allocation7 + $0x650] sm:$0xff]
    %v323 = vld [vmem:[#allocation7 + $0x658] sm:$0xff]
    %v324 = vld [vmem:[#allocation7 + $0x660] sm:$0xff]
    %v325 = vld [vmem:[#allocation7 + $0x668] sm:$0xff]
    %v326 = vld [vmem:[#allocation7 + $0x670] sm:$0xff]
    %v327 = vld [vmem:[#allocation7 + $0x678] sm:$0xff]
    %v328 = vld [vmem:[#allocation7 + $0x680] sm:$0xff]
    %v329 = vld [vmem:[#allocation7 + $0x688] sm:$0xff]
    %v330 = vld [vmem:[#allocation7 + $0x690] sm:$0xff]
    %v331 = vld [vmem:[#allocation7 + $0x698] sm:$0xff]
    %v332 = vld [vmem:[#allocation7 + $0x6a0] sm:$0xff]
    %v333 = vld [vmem:[#allocation7 + $0x6a8] sm:$0xff]
    %v334 = vld [vmem:[#allocation7 + $0x6b0] sm:$0xff]
    %v335 = vld [vmem:[#allocation7 + $0x6b8] sm:$0xff]
    %v336 = vld [vmem:[#allocation7 + $0x6c0] sm:$0xff]
    %v337 = vld [vmem:[#allocation7 + $0x6c8] sm:$0xff]
    %v338 = vld [vmem:[#allocation7 + $0x6d0] sm:$0xff]
    %v339 = vld [vmem:[#allocation7 + $0x6d8] sm:$0xff]
    %v340 = vld [vmem:[#allocation7 + $0x6e0] sm:$0xff]
    %v341 = vld [vmem:[#allocation7 + $0x6e8] sm:$0xff]
    %v342 = vld [vmem:[#allocation7 + $0x6f0] sm:$0xff]
    %v343 = vld [vmem:[#allocation7 + $0x6f8] sm:$0xff]
    %v344 = vld [vmem:[#allocation7 + $0x700] sm:$0xff]
    %v345 = vld [vmem:[#allocation7 + $0x708] sm:$0xff]
    %v346 = vld [vmem:[#allocation7 + $0x710] sm:$0xff]
    %v347 = vld [vmem:[#allocation7 + $0x718] sm:$0xff]
    %v348 = vld [vmem:[#allocation7 + $0x720] sm:$0xff]
    %v349 = vld [vmem:[#allocation7 + $0x728] sm:$0xff]
    %v350 = vld [vmem:[#allocation7 + $0x730] sm:$0xff]
    %v351 = vld [vmem:[#allocation7 + $0x738] sm:$0xff]
    %v352 = vld [vmem:[#allocation7 + $0x740] sm:$0xff]
    %v353 = vld [vmem:[#allocation7 + $0x748] sm:$0xff]
    %v354 = vld [vmem:[#allocation7 + $0x750] sm:$0xff]
    %v355 = vld [vmem:[#allocation7 + $0x758] sm:$0xff]
    %v356 = vld [vmem:[#allocation7 + $0x760] sm:$0xff]
    %v357 = vld [vmem:[#allocation7 + $0x768] sm:$0xff]
    %v358 = vld [vmem:[#allocation7 + $0x770] sm:$0xff]
    %v359 = vld [vmem:[#allocation7 + $0x778] sm:$0xff]
    %v360 = vld [vmem:[#allocation7 + $0x780] sm:$0xff]
    %v361 = vld [vmem:[#allocation7 + $0x788] sm:$0xff]
    %v362 = vld [vmem:[#allocation7 + $0x790] sm:$0xff]
    %v363 = vld [vmem:[#allocation7 + $0x798] sm:$0xff]
    %v364 = vld [vmem:[#allocation7 + $0x7a0] sm:$0xff]
    %v365 = vld [vmem:[#allocation7 + $0x7a8] sm:$0xff]
    %v366 = vld [vmem:[#allocation7 + $0x7b0] sm:$0xff]
    %v367 = vld [vmem:[#allocation7 + $0x7b8] sm:$0xff]
    %v368 = vld [vmem:[#allocation7 + $0x7c0] sm:$0xff]
    %v369 = vld [vmem:[#allocation7 + $0x7c8] sm:$0xff]
    %v370 = vld [vmem:[#allocation7 + $0x7d0] sm:$0xff]
    %v371 = vld [vmem:[#allocation7 + $0x7d8] sm:$0xff]
    %v372 = vld [vmem:[#allocation7 + $0x7e0] sm:$0xff]
    %v373 = vld [vmem:[#allocation7 + $0x7e8] sm:$0xff]
    %v374 = vld [vmem:[#allocation7 + $0x7f0] sm:$0xff]
    %v375 = vld [vmem:[#allocation7 + $0x7f8] sm:$0xff]
    %v377 = vunpack.c.l.b16 %v119
    %v378 = vunpack.c.h.b16 %v119
    %v379 = vpack.c.b16 %v377, %v377
    %v380 = vpack.c.b16 %v378, %v378
    %v511 = vunpack.c.l.b16 %v248
    %v512 = vunpack.c.h.b16 %v248
    %v513 = vunpack.c.l.b16 %v249
    %v514 = vunpack.c.h.b16 %v249
    %v515 = vunpack.c.l.b16 %v250
    %v516 = vunpack.c.h.b16 %v250
    %v517 = vunpack.c.l.b16 %v251
    %v518 = vunpack.c.h.b16 %v251
    %v519 = vunpack.c.l.b16 %v252
    %v520 = vunpack.c.h.b16 %v252
    %v521 = vunpack.c.l.b16 %v253
    %v522 = vunpack.c.h.b16 %v253
    %v523 = vunpack.c.l.b16 %v254
    %v524 = vunpack.c.h.b16 %v254
    %v525 = vunpack.c.l.b16 %v255
    %v526 = vunpack.c.h.b16 %v255
    %v527 = vunpack.c.l.b16 %v256
    %v528 = vunpack.c.h.b16 %v256
    %v529 = vunpack.c.l.b16 %v257
    %v530 = vunpack.c.h.b16 %v257
    %v531 = vunpack.c.l.b16 %v258
    %v532 = vunpack.c.h.b16 %v258
    %v533 = vunpack.c.l.b16 %v259
    %v534 = vunpack.c.h.b16 %v259
    %v535 = vunpack.c.l.b16 %v260
    %v536 = vunpack.c.h.b16 %v260
    %v537 = vunpack.c.l.b16 %v261
    %v538 = vunpack.c.h.b16 %v261
    %v539 = vunpack.c.l.b16 %v262
    %v540 = vunpack.c.h.b16 %v262
    %v541 = vunpack.c.l.b16 %v263
    %v542 = vunpack.c.h.b16 %v263
    %v543 = vunpack.c.l.b16 %v264
    %v544 = vunpack.c.h.b16 %v264
    %v545 = vunpack.c.l.b16 %v265
    %v546 = vunpack.c.h.b16 %v265
    %v547 = vunpack.c.l.b16 %v266
    %v548 = vunpack.c.h.b16 %v266
    %v549 = vunpack.c.l.b16 %v267
    %v550 = vunpack.c.h.b16 %v267
    %v551 = vunpack.c.l.b16 %v268
    %v552 = vunpack.c.h.b16 %v268
    %v553 = vunpack.c.l.b16 %v269
    %v554 = vunpack.c.h.b16 %v269
    %v555 = vunpack.c.l.b16 %v270
    %v556 = vunpack.c.h.b16 %v270
    %v557 = vunpack.c.l.b16 %v271
    %v558 = vunpack.c.h.b16 %v271
    %v559 = vunpack.c.l.b16 %v272
    %v560 = vunpack.c.h.b16 %v272
    %v561 = vunpack.c.l.b16 %v273
    %v562 = vunpack.c.h.b16 %v273
    %v563 = vunpack.c.l.b16 %v274
    %v564 = vunpack.c.h.b16 %v274
    %v565 = vunpack.c.l.b16 %v275
    %v566 = vunpack.c.h.b16 %v275
    %v567 = vunpack.c.l.b16 %v276
    %v568 = vunpack.c.h.b16 %v276
    %v569 = vunpack.c.l.b16 %v277
    %v570 = vunpack.c.h.b16 %v277
    %v571 = vunpack.c.l.b16 %v278
    %v572 = vunpack.c.h.b16 %v278
    %v573 = vunpack.c.l.b16 %v279
    %v574 = vunpack.c.h.b16 %v279
    %v575 = vunpack.c.l.b16 %v280
    %v576 = vunpack.c.h.b16 %v280
    %v577 = vunpack.c.l.b16 %v281
    %v578 = vunpack.c.h.b16 %v281
    %v579 = vunpack.c.l.b16 %v282
    %v580 = vunpack.c.h.b16 %v282
    %v581 = vunpack.c.l.b16 %v283
    %v582 = vunpack.c.h.b16 %v283
    %v583 = vunpack.c.l.b16 %v284
    %v584 = vunpack.c.h.b16 %v284
    %v585 = vunpack.c.l.b16 %v285
    %v586 = vunpack.c.h.b16 %v285
    %v587 = vunpack.c.l.b16 %v286
    %v588 = vunpack.c.h.b16 %v286
    %v589 = vunpack.c.l.b16 %v287
    %v590 = vunpack.c.h.b16 %v287
    %v591 = vunpack.c.l.b16 %v288
    %v592 = vunpack.c.h.b16 %v288
    %v593 = vunpack.c.l.b16 %v289
    %v594 = vunpack.c.h.b16 %v289
    %v595 = vunpack.c.l.b16 %v290
    %v596 = vunpack.c.h.b16 %v290
    %v597 = vunpack.c.l.b16 %v291
    %v598 = vunpack.c.h.b16 %v291
    %v599 = vunpack.c.l.b16 %v292
    %v600 = vunpack.c.h.b16 %v292
    %v601 = vunpack.c.l.b16 %v293
    %v602 = vunpack.c.h.b16 %v293
    %v603 = vunpack.c.l.b16 %v294
    %v604 = vunpack.c.h.b16 %v294
    %v605 = vunpack.c.l.b16 %v295
    %v606 = vunpack.c.h.b16 %v295
    %v607 = vunpack.c.l.b16 %v296
    %v608 = vunpack.c.h.b16 %v296
    %v609 = vunpack.c.l.b16 %v297
    %v610 = vunpack.c.h.b16 %v297
    %v611 = vunpack.c.l.b16 %v298
    %v612 = vunpack.c.h.b16 %v298
    %v613 = vunpack.c.l.b16 %v299
    %v614 = vunpack.c.h.b16 %v299
    %v615 = vunpack.c.l.b16 %v300
    %v616 = vunpack.c.h.b16 %v300
    %v617 = vunpack.c.l.b16 %v301
    %v618 = vunpack.c.h.b16 %v301
    %v619 = vunpack.c.l.b16 %v302
    %v620 = vunpack.c.h.b16 %v302
    %v621 = vunpack.c.l.b16 %v303
    %v622 = vunpack.c.h.b16 %v303
    %v623 = vunpack.c.l.b16 %v304
    %v624 = vunpack.c.h.b16 %v304
    %v625 = vunpack.c.l.b16 %v305
    %v626 = vunpack.c.h.b16 %v305
    %v627 = vunpack.c.l.b16 %v306
    %v628 = vunpack.c.h.b16 %v306
    %v629 = vunpack.c.l.b16 %v307
    %v630 = vunpack.c.h.b16 %v307
    %v631 = vunpack.c.l.b16 %v308
    %v632 = vunpack.c.h.b16 %v308
    %v633 = vunpack.c.l.b16 %v309
    %v634 = vunpack.c.h.b16 %v309
    %v635 = vunpack.c.l.b16 %v310
    %v636 = vunpack.c.h.b16 %v310
    %v637 = vunpack.c.l.b16 %v311
    %v638 = vunpack.c.h.b16 %v311
    %v639 = vunpack.c.l.b16 %v312
    %v640 = vunpack.c.h.b16 %v312
    %v641 = vunpack.c.l.b16 %v313
    %v642 = vunpack.c.h.b16 %v313
    %v643 = vunpack.c.l.b16 %v314
    %v644 = vunpack.c.h.b16 %v314
    %v645 = vunpack.c.l.b16 %v315
    %v646 = vunpack.c.h.b16 %v315
    %v647 = vunpack.c.l.b16 %v316
    %v648 = vunpack.c.h.b16 %v316
    %v649 = vunpack.c.l.b16 %v317
    %v650 = vunpack.c.h.b16 %v317
    %v651 = vunpack.c.l.b16 %v318
    %v652 = vunpack.c.h.b16 %v318
    %v653 = vunpack.c.l.b16 %v319
    %v654 = vunpack.c.h.b16 %v319
    %v655 = vunpack.c.l.b16 %v320
    %v656 = vunpack.c.h.b16 %v320
    %v657 = vunpack.c.l.b16 %v321
    %v658 = vunpack.c.h.b16 %v321
    %v659 = vunpack.c.l.b16 %v322
    %v660 = vunpack.c.h.b16 %v322
    %v661 = vunpack.c.l.b16 %v323
    %v662 = vunpack.c.h.b16 %v323
    %v663 = vunpack.c.l.b16 %v324
    %v664 = vunpack.c.h.b16 %v324
    %v665 = vunpack.c.l.b16 %v325
    %v666 = vunpack.c.h.b16 %v325
    %v667 = vunpack.c.l.b16 %v326
    %v668 = vunpack.c.h.b16 %v326
    %v669 = vunpack.c.l.b16 %v327
    %v670 = vunpack.c.h.b16 %v327
    %v671 = vunpack.c.l.b16 %v328
    %v672 = vunpack.c.h.b16 %v328
    %v673 = vunpack.c.l.b16 %v329
    %v674 = vunpack.c.h.b16 %v329
    %v675 = vunpack.c.l.b16 %v330
    %v676 = vunpack.c.h.b16 %v330
    %v677 = vunpack.c.l.b16 %v331
    %v678 = vunpack.c.h.b16 %v331
    %v679 = vunpack.c.l.b16 %v332
    %v680 = vunpack.c.h.b16 %v332
    %v681 = vunpack.c.l.b16 %v333
    %v682 = vunpack.c.h.b16 %v333
    %v683 = vunpack.c.l.b16 %v334
    %v684 = vunpack.c.h.b16 %v334
    %v685 = vunpack.c.l.b16 %v335
    %v686 = vunpack.c.h.b16 %v335
    %v687 = vunpack.c.l.b16 %v336
    %v688 = vunpack.c.h.b16 %v336
    %v689 = vunpack.c.l.b16 %v337
    %v690 = vunpack.c.h.b16 %v337
    %v691 = vunpack.c.l.b16 %v338
    %v692 = vunpack.c.h.b16 %v338
    %v693 = vunpack.c.l.b16 %v339
    %v694 = vunpack.c.h.b16 %v339
    %v695 = vunpack.c.l.b16 %v340
    %v696 = vunpack.c.h.b16 %v340
    %v697 = vunpack.c.l.b16 %v341
    %v698 = vunpack.c.h.b16 %v341
    %v699 = vunpack.c.l.b16 %v342
    %v700 = vunpack.c.h.b16 %v342
    %v701 = vunpack.c.l.b16 %v343
    %v702 = vunpack.c.h.b16 %v343
    %v703 = vunpack.c.l.b16 %v344
    %v704 = vunpack.c.h.b16 %v344
    %v705 = vunpack.c.l.b16 %v345
    %v706 = vunpack.c.h.b16 %v345
    %v707 = vunpack.c.l.b16 %v346
    %v708 = vunpack.c.h.b16 %v346
    %v709 = vunpack.c.l.b16 %v347
    %v710 = vunpack.c.h.b16 %v347
    %v711 = vunpack.c.l.b16 %v348
    %v712 = vunpack.c.h.b16 %v348
    %v713 = vunpack.c.l.b16 %v349
    %v714 = vunpack.c.h.b16 %v349
    %v715 = vunpack.c.l.b16 %v350
    %v716 = vunpack.c.h.b16 %v350
    %v717 = vunpack.c.l.b16 %v351
    %v718 = vunpack.c.h.b16 %v351
    %v719 = vunpack.c.l.b16 %v352
    %v720 = vunpack.c.h.b16 %v352
    %v721 = vunpack.c.l.b16 %v353
    %v722 = vunpack.c.h.b16 %v353
    %v723 = vunpack.c.l.b16 %v354
    %v724 = vunpack.c.h.b16 %v354
    %v725 = vunpack.c.l.b16 %v355
    %v726 = vunpack.c.h.b16 %v355
    %v727 = vunpack.c.l.b16 %v356
    %v728 = vunpack.c.h.b16 %v356
    %v729 = vunpack.c.l.b16 %v357
    %v730 = vunpack.c.h.b16 %v357
    %v731 = vunpack.c.l.b16 %v358
    %v732 = vunpack.c.h.b16 %v358
    %v733 = vunpack.c.l.b16 %v359
    %v734 = vunpack.c.h.b16 %v359
    %v735 = vunpack.c.l.b16 %v360
    %v736 = vunpack.c.h.b16 %v360
    %v737 = vunpack.c.l.b16 %v361
    %v738 = vunpack.c.h.b16 %v361
    %v739 = vunpack.c.l.b16 %v362
    %v740 = vunpack.c.h.b16 %v362
    %v741 = vunpack.c.l.b16 %v363
    %v742 = vunpack.c.h.b16 %v363
    %v743 = vunpack.c.l.b16 %v364
    %v744 = vunpack.c.h.b16 %v364
    %v745 = vunpack.c.l.b16 %v365
    %v746 = vunpack.c.h.b16 %v365
    %v747 = vunpack.c.l.b16 %v366
    %v748 = vunpack.c.h.b16 %v366
    %v749 = vunpack.c.l.b16 %v367
    %v750 = vunpack.c.h.b16 %v367
    %v751 = vunpack.c.l.b16 %v368
    %v752 = vunpack.c.h.b16 %v368
    %v753 = vunpack.c.l.b16 %v369
    %v754 = vunpack.c.h.b16 %v369
    %v755 = vunpack.c.l.b16 %v370
    %v756 = vunpack.c.h.b16 %v370
    %v757 = vunpack.c.l.b16 %v371
    %v758 = vunpack.c.h.b16 %v371
    %v759 = vunpack.c.l.b16 %v372
    %v760 = vunpack.c.h.b16 %v372
    %v761 = vunpack.c.l.b16 %v373
    %v762 = vunpack.c.h.b16 %v373
    %v763 = vunpack.c.l.b16 %v374
    %v764 = vunpack.c.h.b16 %v374
    %v765 = vunpack.c.l.b16 %v375
    %v766 = vunpack.c.h.b16 %v375
    %v767 = vpack.c.b16 %v519, %v511
    %v768 = vpack.c.b16 %v520, %v512
    %v769 = vpack.c.b16 %v521, %v513
    %v770 = vpack.c.b16 %v522, %v514
    %v771 = vpack.c.b16 %v523, %v515
    %v772 = vpack.c.b16 %v524, %v516
    %v773 = vpack.c.b16 %v525, %v517
    %v774 = vpack.c.b16 %v526, %v518
    %v775 = vpack.c.b16 %v535, %v527
    %v776 = vpack.c.b16 %v536, %v528
    %v777 = vpack.c.b16 %v537, %v529
    %v778 = vpack.c.b16 %v538, %v530
    %v779 = vpack.c.b16 %v539, %v531
    %v780 = vpack.c.b16 %v540, %v532
    %v781 = vpack.c.b16 %v541, %v533
    %v782 = vpack.c.b16 %v542, %v534
    %v783 = vpack.c.b16 %v551, %v543
    %v784 = vpack.c.b16 %v552, %v544
    %v785 = vpack.c.b16 %v553, %v545
    %v786 = vpack.c.b16 %v554, %v546
    %v787 = vpack.c.b16 %v555, %v547
    %v788 = vpack.c.b16 %v556, %v548
    %v789 = vpack.c.b16 %v557, %v549
    %v790 = vpack.c.b16 %v558, %v550
    %v791 = vpack.c.b16 %v567, %v559
    %v792 = vpack.c.b16 %v568, %v560
    %v793 = vpack.c.b16 %v569, %v561
    %v794 = vpack.c.b16 %v570, %v562
    %v795 = vpack.c.b16 %v571, %v563
    %v796 = vpack.c.b16 %v572, %v564
    %v797 = vpack.c.b16 %v573, %v565
    %v798 = vpack.c.b16 %v574, %v566
    %v799 = vpack.c.b16 %v583, %v575
    %v800 = vpack.c.b16 %v584, %v576
    %v801 = vpack.c.b16 %v585, %v577
    %v802 = vpack.c.b16 %v586, %v578
    %v803 = vpack.c.b16 %v587, %v579
    %v804 = vpack.c.b16 %v588, %v580
    %v805 = vpack.c.b16 %v589, %v581
    %v806 = vpack.c.b16 %v590, %v582
    %v807 = vpack.c.b16 %v599, %v591
    %v808 = vpack.c.b16 %v600, %v592
    %v809 = vpack.c.b16 %v601, %v593
    %v810 = vpack.c.b16 %v602, %v594
    %v811 = vpack.c.b16 %v603, %v595
    %v812 = vpack.c.b16 %v604, %v596
    %v813 = vpack.c.b16 %v605, %v597
    %v814 = vpack.c.b16 %v606, %v598
    %v815 = vpack.c.b16 %v615, %v607
    %v816 = vpack.c.b16 %v616, %v608
    %v817 = vpack.c.b16 %v617, %v609
    %v818 = vpack.c.b16 %v618, %v610
    %v819 = vpack.c.b16 %v619, %v611
    %v820 = vpack.c.b16 %v620, %v612
    %v821 = vpack.c.b16 %v621, %v613
    %v822 = vpack.c.b16 %v622, %v614
    %v823 = vpack.c.b16 %v631, %v623
    %v824 = vpack.c.b16 %v632, %v624
    %v825 = vpack.c.b16 %v633, %v625
    %v826 = vpack.c.b16 %v634, %v626
    %v827 = vpack.c.b16 %v635, %v627
    %v828 = vpack.c.b16 %v636, %v628
    %v829 = vpack.c.b16 %v637, %v629
    %v830 = vpack.c.b16 %v638, %v630
    %v831 = vpack.c.b16 %v647, %v639
    %v832 = vpack.c.b16 %v648, %v640
    %v833 = vpack.c.b16 %v649, %v641
    %v834 = vpack.c.b16 %v650, %v642
    %v835 = vpack.c.b16 %v651, %v643
    %v836 = vpack.c.b16 %v652, %v644
    %v837 = vpack.c.b16 %v653, %v645
    %v838 = vpack.c.b16 %v654, %v646
    %v839 = vpack.c.b16 %v663, %v655
    %v840 = vpack.c.b16 %v664, %v656
    %v841 = vpack.c.b16 %v665, %v657
    %v842 = vpack.c.b16 %v666, %v658
    %v843 = vpack.c.b16 %v667, %v659
    %v844 = vpack.c.b16 %v668, %v660
    %v845 = vpack.c.b16 %v669, %v661
    %v846 = vpack.c.b16 %v670, %v662
    %v847 = vpack.c.b16 %v679, %v671
    %v848 = vpack.c.b16 %v680, %v672
    %v849 = vpack.c.b16 %v681, %v673
    %v850 = vpack.c.b16 %v682, %v674
    %v851 = vpack.c.b16 %v683, %v675
    %v852 = vpack.c.b16 %v684, %v676
    %v853 = vpack.c.b16 %v685, %v677
    %v854 = vpack.c.b16 %v686, %v678
    %v855 = vpack.c.b16 %v695, %v687
    %v856 = vpack.c.b16 %v696, %v688
    %v857 = vpack.c.b16 %v697, %v689
    %v858 = vpack.c.b16 %v698, %v690
    %v859 = vpack.c.b16 %v699, %v691
    %v860 = vpack.c.b16 %v700, %v692
    %v861 = vpack.c.b16 %v701, %v693
    %v862 = vpack.c.b16 %v702, %v694
    %v863 = vpack.c.b16 %v711, %v703
    %v864 = vpack.c.b16 %v712, %v704
    %v865 = vpack.c.b16 %v713, %v705
    %v866 = vpack.c.b16 %v714, %v706
    %v867 = vpack.c.b16 %v715, %v707
    %v868 = vpack.c.b16 %v716, %v708
    %v869 = vpack.c.b16 %v717, %v709
    %v870 = vpack.c.b16 %v718, %v710
    %v871 = vpack.c.b16 %v727, %v719
    %v872 = vpack.c.b16 %v728, %v720
    %v873 = vpack.c.b16 %v729, %v721
    %v874 = vpack.c.b16 %v730, %v722
    %v875 = vpack.c.b16 %v731, %v723
    %v876 = vpack.c.b16 %v732, %v724
    %v877 = vpack.c.b16 %v733, %v725
    %v878 = vpack.c.b16 %v734, %v726
    %v879 = vpack.c.b16 %v743, %v735
    %v880 = vpack.c.b16 %v744, %v736
    %v881 = vpack.c.b16 %v745, %v737
    %v882 = vpack.c.b16 %v746, %v738
    %v883 = vpack.c.b16 %v747, %v739
    %v884 = vpack.c.b16 %v748, %v740
    %v885 = vpack.c.b16 %v749, %v741
    %v886 = vpack.c.b16 %v750, %v742
    %v887 = vpack.c.b16 %v759, %v751
    %v888 = vpack.c.b16 %v760, %v752
    %v889 = vpack.c.b16 %v761, %v753
    %v890 = vpack.c.b16 %v762, %v754
    %v891 = vpack.c.b16 %v763, %v755
    %v892 = vpack.c.b16 %v764, %v756
    %v893 = vpack.c.b16 %v765, %v757
    %v894 = vpack.c.b16 %v766, %v758
    %1023 = vmatpush.bf16.msra.mxu0 %v823
    %1024 = vmatpush.bf16.msra.mxu0 %v815
    %1025 = vmatpush.bf16.msra.mxu0 %v807
    %1026 = vmatpush.bf16.msra.mxu0 %v799
    %1027 = vmatpush.bf16.msra.mxu0 %v791
    %1028 = vmatpush.bf16.msra.mxu0 %v783
    %1029 = vmatpush.bf16.msra.mxu0 %v775
    %1030 = vmatpush.bf16.msra.mxu0 %v767
    %1031 = vmatmul.bf16.gmra.mxu0 %v379
    %v1032 = vpop.f32.mrf.mxu0
    %v1033 = vadd.f32 0.0, %v1032
    %v1034 = vpop.f32.mrf.mxu0
    %1035 = vdwg.mxu0
    %1036 = vmatpush.bf16.msra.mxu0 %v887
    %1037 = vmatpush.bf16.msra.mxu0 %v879
    %1038 = vmatpush.bf16.msra.mxu0 %v871
    %1039 = vmatpush.bf16.msra.mxu0 %v863
    %1040 = vmatpush.bf16.msra.mxu0 %v855
    %1041 = vmatpush.bf16.msra.mxu0 %v847
    %1042 = vmatpush.bf16.msra.mxu0 %v839
    %1043 = vmatpush.bf16.msra.mxu0 %v831
    %1044 = vmatmul.bf16.gmra.mxu0 %v380
    %v1045 = vpop.f32.mrf.mxu0
    %v1046 = vadd.f32 %v1033, %v1045
    %v1047 = vpop.f32.mrf.mxu0
    %1048 = vdwg.mxu0
    %1049 = vmatpush.bf16.msra.mxu0 %v824
    %1050 = vmatpush.bf16.msra.mxu0 %v816
    %1051 = vmatpush.bf16.msra.mxu0 %v808
    %1052 = vmatpush.bf16.msra.mxu0 %v800
    %1053 = vmatpush.bf16.msra.mxu0 %v792
    %1054 = vmatpush.bf16.msra.mxu0 %v784
    %1055 = vmatpush.bf16.msra.mxu0 %v776
    %1056 = vmatpush.bf16.msra.mxu0 %v768
    %1057 = vmatmul.bf16.gmra.mxu0 %v379
    %v1058 = vpop.f32.mrf.mxu0
    %v1059 = vadd.f32 0.0, %v1058
    %v1060 = vpop.f32.mrf.mxu0
    %1061 = vdwg.mxu0
    %1062 = vmatpush.bf16.msra.mxu0 %v888
    %1063 = vmatpush.bf16.msra.mxu0 %v880
    %1064 = vmatpush.bf16.msra.mxu0 %v872
    %1065 = vmatpush.bf16.msra.mxu0 %v864
    %1066 = vmatpush.bf16.msra.mxu0 %v856
    %1067 = vmatpush.bf16.msra.mxu0 %v848
    %1068 = vmatpush.bf16.msra.mxu0 %v840
    %1069 = vmatpush.bf16.msra.mxu0 %v832
    %1070 = vmatmul.bf16.gmra.mxu0 %v380
    %v1071 = vpop.f32.mrf.mxu0
    %v1072 = vadd.f32 %v1059, %v1071
    %v1073 = vpop.f32.mrf.mxu0
    %1074 = vdwg.mxu0
    %1075 = vmatpush.bf16.msra.mxu0 %v825
    %1076 = vmatpush.bf16.msra.mxu0 %v817
    %1077 = vmatpush.bf16.msra.mxu0 %v809
    %1078 = vmatpush.bf16.msra.mxu0 %v801
    %1079 = vmatpush.bf16.msra.mxu0 %v793
    %1080 = vmatpush.bf16.msra.mxu0 %v785
    %1081 = vmatpush.bf16.msra.mxu0 %v777
    %1082 = vmatpush.bf16.msra.mxu0 %v769
    %1083 = vmatmul.bf16.gmra.mxu0 %v379
    %v1084 = vpop.f32.mrf.mxu0
    %v1085 = vadd.f32 0.0, %v1084
    %v1086 = vpop.f32.mrf.mxu0
    %1087 = vdwg.mxu0
    %1088 = vmatpush.bf16.msra.mxu0 %v889
    %1089 = vmatpush.bf16.msra.mxu0 %v881
    %1090 = vmatpush.bf16.msra.mxu0 %v873
    %1091 = vmatpush.bf16.msra.mxu0 %v865
    %1092 = vmatpush.bf16.msra.mxu0 %v857
    %1093 = vmatpush.bf16.msra.mxu0 %v849
    %1094 = vmatpush.bf16.msra.mxu0 %v841
    %1095 = vmatpush.bf16.msra.mxu0 %v833
    %1096 = vmatmul.bf16.gmra.mxu0 %v380
    %v1097 = vpop.f32.mrf.mxu0
    %v1098 = vadd.f32 %v1085, %v1097
    %v1099 = vpop.f32.mrf.mxu0
    %1100 = vdwg.mxu0
    %1101 = vmatpush.bf16.msra.mxu0 %v826
    %1102 = vmatpush.bf16.msra.mxu0 %v818
    %1103 = vmatpush.bf16.msra.mxu0 %v810
    %1104 = vmatpush.bf16.msra.mxu0 %v802
    %1105 = vmatpush.bf16.msra.mxu0 %v794
    %1106 = vmatpush.bf16.msra.mxu0 %v786
    %1107 = vmatpush.bf16.msra.mxu0 %v778
    %1108 = vmatpush.bf16.msra.mxu0 %v770
    %1109 = vmatmul.bf16.gmra.mxu0 %v379
    %v1110 = vpop.f32.mrf.mxu0
    %v1111 = vadd.f32 0.0, %v1110
    %v1112 = vpop.f32.mrf.mxu0
    %1113 = vdwg.mxu0
    %1114 = vmatpush.bf16.msra.mxu0 %v890
    %1115 = vmatpush.bf16.msra.mxu0 %v882
    %1116 = vmatpush.bf16.msra.mxu0 %v874
    %1117 = vmatpush.bf16.msra.mxu0 %v866
    %1118 = vmatpush.bf16.msra.mxu0 %v858
    %1119 = vmatpush.bf16.msra.mxu0 %v850
    %1120 = vmatpush.bf16.msra.mxu0 %v842
    %1121 = vmatpush.bf16.msra.mxu0 %v834
    %1122 = vmatmul.bf16.gmra.mxu0 %v380
    %v1123 = vpop.f32.mrf.mxu0
    %v1124 = vadd.f32 %v1111, %v1123
    %v1125 = vpop.f32.mrf.mxu0
    %1126 = vdwg.mxu0
    %1127 = vmatpush.bf16.msra.mxu0 %v827
    %1128 = vmatpush.bf16.msra.mxu0 %v819
    %1129 = vmatpush.bf16.msra.mxu0 %v811
    %1130 = vmatpush.bf16.msra.mxu0 %v803
    %1131 = vmatpush.bf16.msra.mxu0 %v795
    %1132 = vmatpush.bf16.msra.mxu0 %v787
    %1133 = vmatpush.bf16.msra.mxu0 %v779
    %1134 = vmatpush.bf16.msra.mxu0 %v771
    %1135 = vmatmul.bf16.gmra.mxu0 %v379
    %v1136 = vpop.f32.mrf.mxu0
    %v1137 = vadd.f32 0.0, %v1136
    %v1138 = vpop.f32.mrf.mxu0
    %1139 = vdwg.mxu0
    %1140 = vmatpush.bf16.msra.mxu0 %v891
    %1141 = vmatpush.bf16.msra.mxu0 %v883
    %1142 = vmatpush.bf16.msra.mxu0 %v875
    %1143 = vmatpush.bf16.msra.mxu0 %v867
    %1144 = vmatpush.bf16.msra.mxu0 %v859
    %1145 = vmatpush.bf16.msra.mxu0 %v851
    %1146 = vmatpush.bf16.msra.mxu0 %v843
    %1147 = vmatpush.bf16.msra.mxu0 %v835
    %1148 = vmatmul.bf16.gmra.mxu0 %v380
    %v1149 = vpop.f32.mrf.mxu0
    %v1150 = vadd.f32 %v1137, %v1149
    %v1151 = vpop.f32.mrf.mxu0
    %1152 = vdwg.mxu0
    %1153 = vmatpush.bf16.msra.mxu0 %v828
    %1154 = vmatpush.bf16.msra.mxu0 %v820
    %1155 = vmatpush.bf16.msra.mxu0 %v812
    %1156 = vmatpush.bf16.msra.mxu0 %v804
    %1157 = vmatpush.bf16.msra.mxu0 %v796
    %1158 = vmatpush.bf16.msra.mxu0 %v788
    %1159 = vmatpush.bf16.msra.mxu0 %v780
    %1160 = vmatpush.bf16.msra.mxu0 %v772
    %1161 = vmatmul.bf16.gmra.mxu0 %v379
    %v1162 = vpop.f32.mrf.mxu0
    %v1163 = vadd.f32 0.0, %v1162
    %v1164 = vpop.f32.mrf.mxu0
    %1165 = vdwg.mxu0
    %1166 = vmatpush.bf16.msra.mxu0 %v892
    %1167 = vmatpush.bf16.msra.mxu0 %v884
    %1168 = vmatpush.bf16.msra.mxu0 %v876
    %1169 = vmatpush.bf16.msra.mxu0 %v868
    %1170 = vmatpush.bf16.msra.mxu0 %v860
    %1171 = vmatpush.bf16.msra.mxu0 %v852
    %1172 = vmatpush.bf16.msra.mxu0 %v844
    %1173 = vmatpush.bf16.msra.mxu0 %v836
    %1174 = vmatmul.bf16.gmra.mxu0 %v380
    %v1175 = vpop.f32.mrf.mxu0
    %v1176 = vadd.f32 %v1163, %v1175
    %v1177 = vpop.f32.mrf.mxu0
    %1178 = vdwg.mxu0
    %1179 = vmatpush.bf16.msra.mxu0 %v829
    %1180 = vmatpush.bf16.msra.mxu0 %v821
    %1181 = vmatpush.bf16.msra.mxu0 %v813
    %1182 = vmatpush.bf16.msra.mxu0 %v805
    %1183 = vmatpush.bf16.msra.mxu0 %v797
    %1184 = vmatpush.bf16.msra.mxu0 %v789
    %1185 = vmatpush.bf16.msra.mxu0 %v781
    %1186 = vmatpush.bf16.msra.mxu0 %v773
    %1187 = vmatmul.bf16.gmra.mxu0 %v379
    %v1188 = vpop.f32.mrf.mxu0
    %v1189 = vadd.f32 0.0, %v1188
    %v1190 = vpop.f32.mrf.mxu0
    %1191 = vdwg.mxu0
    %1192 = vmatpush.bf16.msra.mxu0 %v893
    %1193 = vmatpush.bf16.msra.mxu0 %v885
    %1194 = vmatpush.bf16.msra.mxu0 %v877
    %1195 = vmatpush.bf16.msra.mxu0 %v869
    %1196 = vmatpush.bf16.msra.mxu0 %v861
    %1197 = vmatpush.bf16.msra.mxu0 %v853
    %1198 = vmatpush.bf16.msra.mxu0 %v845
    %1199 = vmatpush.bf16.msra.mxu0 %v837
    %1200 = vmatmul.bf16.gmra.mxu0 %v380
    %v1201 = vpop.f32.mrf.mxu0
    %v1202 = vadd.f32 %v1189, %v1201
    %v1203 = vpop.f32.mrf.mxu0
    %1204 = vdwg.mxu0
    %1205 = vmatpush.bf16.msra.mxu0 %v830
    %1206 = vmatpush.bf16.msra.mxu0 %v822
    %1207 = vmatpush.bf16.msra.mxu0 %v814
    %1208 = vmatpush.bf16.msra.mxu0 %v806
    %1209 = vmatpush.bf16.msra.mxu0 %v798
    %1210 = vmatpush.bf16.msra.mxu0 %v790
    %1211 = vmatpush.bf16.msra.mxu0 %v782
    %1212 = vmatpush.bf16.msra.mxu0 %v774
    %1213 = vmatmul.bf16.gmra.mxu0 %v379
    %v1214 = vpop.f32.mrf.mxu0
    %v1215 = vadd.f32 0.0, %v1214
    %v1216 = vpop.f32.mrf.mxu0
    %1217 = vdwg.mxu0
    %1218 = vmatpush.bf16.msra.mxu0 %v894
    %1219 = vmatpush.bf16.msra.mxu0 %v886
    %1220 = vmatpush.bf16.msra.mxu0 %v878
    %1221 = vmatpush.bf16.msra.mxu0 %v870
    %1222 = vmatpush.bf16.msra.mxu0 %v862
    %1223 = vmatpush.bf16.msra.mxu0 %v854
    %1224 = vmatpush.bf16.msra.mxu0 %v846
    %1225 = vmatpush.bf16.msra.mxu0 %v838
    %1226 = vmatmul.bf16.gmra.mxu0 %v380
    %v1227 = vpop.f32.mrf.mxu0
    %v1228 = vadd.f32 %v1215, %v1227
    %v1229 = vpop.f32.mrf.mxu0
    %1230 = vdwg.mxu0
    %v1232 = vunpack.c.l.b16 %v118
    %v1233 = vunpack.c.h.b16 %v118
    %v1234 = vpack.c.b16 %v1232, %v1232
    %v1235 = vpack.c.b16 %v1233, %v1233
    %v1366 = vunpack.c.l.b16 %v120
    %v1367 = vunpack.c.h.b16 %v120
    %v1368 = vunpack.c.l.b16 %v121
    %v1369 = vunpack.c.h.b16 %v121
    %v1370 = vunpack.c.l.b16 %v122
    %v1371 = vunpack.c.h.b16 %v122
    %v1372 = vunpack.c.l.b16 %v123
    %v1373 = vunpack.c.h.b16 %v123
    %v1374 = vunpack.c.l.b16 %v124
    %v1375 = vunpack.c.h.b16 %v124
    %v1376 = vunpack.c.l.b16 %v125
    %v1377 = vunpack.c.h.b16 %v125
    %v1378 = vunpack.c.l.b16 %v126
    %v1379 = vunpack.c.h.b16 %v126
    %v1380 = vunpack.c.l.b16 %v127
    %v1381 = vunpack.c.h.b16 %v127
    %v1382 = vunpack.c.l.b16 %v128
    %v1383 = vunpack.c.h.b16 %v128
    %v1384 = vunpack.c.l.b16 %v129
    %v1385 = vunpack.c.h.b16 %v129
    %v1386 = vunpack.c.l.b16 %v130
    %v1387 = vunpack.c.h.b16 %v130
    %v1388 = vunpack.c.l.b16 %v131
    %v1389 = vunpack.c.h.b16 %v131
    %v1390 = vunpack.c.l.b16 %v132
    %v1391 = vunpack.c.h.b16 %v132
    %v1392 = vunpack.c.l.b16 %v133
    %v1393 = vunpack.c.h.b16 %v133
    %v1394 = vunpack.c.l.b16 %v134
    %v1395 = vunpack.c.h.b16 %v134
    %v1396 = vunpack.c.l.b16 %v135
    %v1397 = vunpack.c.h.b16 %v135
    %v1398 = vunpack.c.l.b16 %v136
    %v1399 = vunpack.c.h.b16 %v136
    %v1400 = vunpack.c.l.b16 %v137
    %v1401 = vunpack.c.h.b16 %v137
    %v1402 = vunpack.c.l.b16 %v138
    %v1403 = vunpack.c.h.b16 %v138
    %v1404 = vunpack.c.l.b16 %v139
    %v1405 = vunpack.c.h.b16 %v139
    %v1406 = vunpack.c.l.b16 %v140
    %v1407 = vunpack.c.h.b16 %v140
    %v1408 = vunpack.c.l.b16 %v141
    %v1409 = vunpack.c.h.b16 %v141
    %v1410 = vunpack.c.l.b16 %v142
    %v1411 = vunpack.c.h.b16 %v142
    %v1412 = vunpack.c.l.b16 %v143
    %v1413 = vunpack.c.h.b16 %v143
    %v1414 = vunpack.c.l.b16 %v144
    %v1415 = vunpack.c.h.b16 %v144
    %v1416 = vunpack.c.l.b16 %v145
    %v1417 = vunpack.c.h.b16 %v145
    %v1418 = vunpack.c.l.b16 %v146
    %v1419 = vunpack.c.h.b16 %v146
    %v1420 = vunpack.c.l.b16 %v147
    %v1421 = vunpack.c.h.b16 %v147
    %v1422 = vunpack.c.l.b16 %v148
    %v1423 = vunpack.c.h.b16 %v148
    %v1424 = vunpack.c.l.b16 %v149
    %v1425 = vunpack.c.h.b16 %v149
    %v1426 = vunpack.c.l.b16 %v150
    %v1427 = vunpack.c.h.b16 %v150
    %v1428 = vunpack.c.l.b16 %v151
    %v1429 = vunpack.c.h.b16 %v151
    %v1430 = vunpack.c.l.b16 %v152
    %v1431 = vunpack.c.h.b16 %v152
    %v1432 = vunpack.c.l.b16 %v153
    %v1433 = vunpack.c.h.b16 %v153
    %v1434 = vunpack.c.l.b16 %v154
    %v1435 = vunpack.c.h.b16 %v154
    %v1436 = vunpack.c.l.b16 %v155
    %v1437 = vunpack.c.h.b16 %v155
    %v1438 = vunpack.c.l.b16 %v156
    %v1439 = vunpack.c.h.b16 %v156
    %v1440 = vunpack.c.l.b16 %v157
    %v1441 = vunpack.c.h.b16 %v157
    %v1442 = vunpack.c.l.b16 %v158
    %v1443 = vunpack.c.h.b16 %v158
    %v1444 = vunpack.c.l.b16 %v159
    %v1445 = vunpack.c.h.b16 %v159
    %v1446 = vunpack.c.l.b16 %v160
    %v1447 = vunpack.c.h.b16 %v160
    %v1448 = vunpack.c.l.b16 %v161
    %v1449 = vunpack.c.h.b16 %v161
    %v1450 = vunpack.c.l.b16 %v162
    %v1451 = vunpack.c.h.b16 %v162
    %v1452 = vunpack.c.l.b16 %v163
    %v1453 = vunpack.c.h.b16 %v163
    %v1454 = vunpack.c.l.b16 %v164
    %v1455 = vunpack.c.h.b16 %v164
    %v1456 = vunpack.c.l.b16 %v165
    %v1457 = vunpack.c.h.b16 %v165
    %v1458 = vunpack.c.l.b16 %v166
    %v1459 = vunpack.c.h.b16 %v166
    %v1460 = vunpack.c.l.b16 %v167
    %v1461 = vunpack.c.h.b16 %v167
    %v1462 = vunpack.c.l.b16 %v168
    %v1463 = vunpack.c.h.b16 %v168
    %v1464 = vunpack.c.l.b16 %v169
    %v1465 = vunpack.c.h.b16 %v169
    %v1466 = vunpack.c.l.b16 %v170
    %v1467 = vunpack.c.h.b16 %v170
    %v1468 = vunpack.c.l.b16 %v171
    %v1469 = vunpack.c.h.b16 %v171
    %v1470 = vunpack.c.l.b16 %v172
    %v1471 = vunpack.c.h.b16 %v172
    %v1472 = vunpack.c.l.b16 %v173
    %v1473 = vunpack.c.h.b16 %v173
    %v1474 = vunpack.c.l.b16 %v174
    %v1475 = vunpack.c.h.b16 %v174
    %v1476 = vunpack.c.l.b16 %v175
    %v1477 = vunpack.c.h.b16 %v175
    %v1478 = vunpack.c.l.b16 %v176
    %v1479 = vunpack.c.h.b16 %v176
    %v1480 = vunpack.c.l.b16 %v177
    %v1481 = vunpack.c.h.b16 %v177
    %v1482 = vunpack.c.l.b16 %v178
    %v1483 = vunpack.c.h.b16 %v178
    %v1484 = vunpack.c.l.b16 %v179
    %v1485 = vunpack.c.h.b16 %v179
    %v1486 = vunpack.c.l.b16 %v180
    %v1487 = vunpack.c.h.b16 %v180
    %v1488 = vunpack.c.l.b16 %v181
    %v1489 = vunpack.c.h.b16 %v181
    %v1490 = vunpack.c.l.b16 %v182
    %v1491 = vunpack.c.h.b16 %v182
    %v1492 = vunpack.c.l.b16 %v183
    %v1493 = vunpack.c.h.b16 %v183
    %v1494 = vunpack.c.l.b16 %v184
    %v1495 = vunpack.c.h.b16 %v184
    %v1496 = vunpack.c.l.b16 %v185
    %v1497 = vunpack.c.h.b16 %v185
    %v1498 = vunpack.c.l.b16 %v186
    %v1499 = vunpack.c.h.b16 %v186
    %v1500 = vunpack.c.l.b16 %v187
    %v1501 = vunpack.c.h.b16 %v187
    %v1502 = vunpack.c.l.b16 %v188
    %v1503 = vunpack.c.h.b16 %v188
    %v1504 = vunpack.c.l.b16 %v189
    %v1505 = vunpack.c.h.b16 %v189
    %v1506 = vunpack.c.l.b16 %v190
    %v1507 = vunpack.c.h.b16 %v190
    %v1508 = vunpack.c.l.b16 %v191
    %v1509 = vunpack.c.h.b16 %v191
    %v1510 = vunpack.c.l.b16 %v192
    %v1511 = vunpack.c.h.b16 %v192
    %v1512 = vunpack.c.l.b16 %v193
    %v1513 = vunpack.c.h.b16 %v193
    %v1514 = vunpack.c.l.b16 %v194
    %v1515 = vunpack.c.h.b16 %v194
    %v1516 = vunpack.c.l.b16 %v195
    %v1517 = vunpack.c.h.b16 %v195
    %v1518 = vunpack.c.l.b16 %v196
    %v1519 = vunpack.c.h.b16 %v196
    %v1520 = vunpack.c.l.b16 %v197
    %v1521 = vunpack.c.h.b16 %v197
    %v1522 = vunpack.c.l.b16 %v198
    %v1523 = vunpack.c.h.b16 %v198
    %v1524 = vunpack.c.l.b16 %v199
    %v1525 = vunpack.c.h.b16 %v199
    %v1526 = vunpack.c.l.b16 %v200
    %v1527 = vunpack.c.h.b16 %v200
    %v1528 = vunpack.c.l.b16 %v201
    %v1529 = vunpack.c.h.b16 %v201
    %v1530 = vunpack.c.l.b16 %v202
    %v1531 = vunpack.c.h.b16 %v202
    %v1532 = vunpack.c.l.b16 %v203
    %v1533 = vunpack.c.h.b16 %v203
    %v1534 = vunpack.c.l.b16 %v204
    %v1535 = vunpack.c.h.b16 %v204
    %v1536 = vunpack.c.l.b16 %v205
    %v1537 = vunpack.c.h.b16 %v205
    %v1538 = vunpack.c.l.b16 %v206
    %v1539 = vunpack.c.h.b16 %v206
    %v1540 = vunpack.c.l.b16 %v207
    %v1541 = vunpack.c.h.b16 %v207
    %v1542 = vunpack.c.l.b16 %v208
    %v1543 = vunpack.c.h.b16 %v208
    %v1544 = vunpack.c.l.b16 %v209
    %v1545 = vunpack.c.h.b16 %v209
    %v1546 = vunpack.c.l.b16 %v210
    %v1547 = vunpack.c.h.b16 %v210
    %v1548 = vunpack.c.l.b16 %v211
    %v1549 = vunpack.c.h.b16 %v211
    %v1550 = vunpack.c.l.b16 %v212
    %v1551 = vunpack.c.h.b16 %v212
    %v1552 = vunpack.c.l.b16 %v213
    %v1553 = vunpack.c.h.b16 %v213
    %v1554 = vunpack.c.l.b16 %v214
    %v1555 = vunpack.c.h.b16 %v214
    %v1556 = vunpack.c.l.b16 %v215
    %v1557 = vunpack.c.h.b16 %v215
    %v1558 = vunpack.c.l.b16 %v216
    %v1559 = vunpack.c.h.b16 %v216
    %v1560 = vunpack.c.l.b16 %v217
    %v1561 = vunpack.c.h.b16 %v217
    %v1562 = vunpack.c.l.b16 %v218
    %v1563 = vunpack.c.h.b16 %v218
    %v1564 = vunpack.c.l.b16 %v219
    %v1565 = vunpack.c.h.b16 %v219
    %v1566 = vunpack.c.l.b16 %v220
    %v1567 = vunpack.c.h.b16 %v220
    %v1568 = vunpack.c.l.b16 %v221
    %v1569 = vunpack.c.h.b16 %v221
    %v1570 = vunpack.c.l.b16 %v222
    %v1571 = vunpack.c.h.b16 %v222
    %v1572 = vunpack.c.l.b16 %v223
    %v1573 = vunpack.c.h.b16 %v223
    %v1574 = vunpack.c.l.b16 %v224
    %v1575 = vunpack.c.h.b16 %v224
    %v1576 = vunpack.c.l.b16 %v225
    %v1577 = vunpack.c.h.b16 %v225
    %v1578 = vunpack.c.l.b16 %v226
    %v1579 = vunpack.c.h.b16 %v226
    %v1580 = vunpack.c.l.b16 %v227
    %v1581 = vunpack.c.h.b16 %v227
    %v1582 = vunpack.c.l.b16 %v228
    %v1583 = vunpack.c.h.b16 %v228
    %v1584 = vunpack.c.l.b16 %v229
    %v1585 = vunpack.c.h.b16 %v229
    %v1586 = vunpack.c.l.b16 %v230
    %v1587 = vunpack.c.h.b16 %v230
    %v1588 = vunpack.c.l.b16 %v231
    %v1589 = vunpack.c.h.b16 %v231
    %v1590 = vunpack.c.l.b16 %v232
    %v1591 = vunpack.c.h.b16 %v232
    %v1592 = vunpack.c.l.b16 %v233
    %v1593 = vunpack.c.h.b16 %v233
    %v1594 = vunpack.c.l.b16 %v234
    %v1595 = vunpack.c.h.b16 %v234
    %v1596 = vunpack.c.l.b16 %v235
    %v1597 = vunpack.c.h.b16 %v235
    %v1598 = vunpack.c.l.b16 %v236
    %v1599 = vunpack.c.h.b16 %v236
    %v1600 = vunpack.c.l.b16 %v237
    %v1601 = vunpack.c.h.b16 %v237
    %v1602 = vunpack.c.l.b16 %v238
    %v1603 = vunpack.c.h.b16 %v238
    %v1604 = vunpack.c.l.b16 %v239
    %v1605 = vunpack.c.h.b16 %v239
    %v1606 = vunpack.c.l.b16 %v240
    %v1607 = vunpack.c.h.b16 %v240
    %v1608 = vunpack.c.l.b16 %v241
    %v1609 = vunpack.c.h.b16 %v241
    %v1610 = vunpack.c.l.b16 %v242
    %v1611 = vunpack.c.h.b16 %v242
    %v1612 = vunpack.c.l.b16 %v243
    %v1613 = vunpack.c.h.b16 %v243
    %v1614 = vunpack.c.l.b16 %v244
    %v1615 = vunpack.c.h.b16 %v244
    %v1616 = vunpack.c.l.b16 %v245
    %v1617 = vunpack.c.h.b16 %v245
    %v1618 = vunpack.c.l.b16 %v246
    %v1619 = vunpack.c.h.b16 %v246
    %v1620 = vunpack.c.l.b16 %v247
    %v1621 = vunpack.c.h.b16 %v247
    %v1622 = vpack.c.b16 %v1374, %v1366
    %v1623 = vpack.c.b16 %v1375, %v1367
    %v1624 = vpack.c.b16 %v1376, %v1368
    %v1625 = vpack.c.b16 %v1377, %v1369
    %v1626 = vpack.c.b16 %v1378, %v1370
    %v1627 = vpack.c.b16 %v1379, %v1371
    %v1628 = vpack.c.b16 %v1380, %v1372
    %v1629 = vpack.c.b16 %v1381, %v1373
    %v1630 = vpack.c.b16 %v1390, %v1382
    %v1631 = vpack.c.b16 %v1391, %v1383
    %v1632 = vpack.c.b16 %v1392, %v1384
    %v1633 = vpack.c.b16 %v1393, %v1385
    %v1634 = vpack.c.b16 %v1394, %v1386
    %v1635 = vpack.c.b16 %v1395, %v1387
    %v1636 = vpack.c.b16 %v1396, %v1388
    %v1637 = vpack.c.b16 %v1397, %v1389
    %v1638 = vpack.c.b16 %v1406, %v1398
    %v1639 = vpack.c.b16 %v1407, %v1399
    %v1640 = vpack.c.b16 %v1408, %v1400
    %v1641 = vpack.c.b16 %v1409, %v1401
    %v1642 = vpack.c.b16 %v1410, %v1402
    %v1643 = vpack.c.b16 %v1411, %v1403
    %v1644 = vpack.c.b16 %v1412, %v1404
    %v1645 = vpack.c.b16 %v1413, %v1405
    %v1646 = vpack.c.b16 %v1422, %v1414
    %v1647 = vpack.c.b16 %v1423, %v1415
    %v1648 = vpack.c.b16 %v1424, %v1416
    %v1649 = vpack.c.b16 %v1425, %v1417
    %v1650 = vpack.c.b16 %v1426, %v1418
    %v1651 = vpack.c.b16 %v1427, %v1419
    %v1652 = vpack.c.b16 %v1428, %v1420
    %v1653 = vpack.c.b16 %v1429, %v1421
    %v1654 = vpack.c.b16 %v1438, %v1430
    %v1655 = vpack.c.b16 %v1439, %v1431
    %v1656 = vpack.c.b16 %v1440, %v1432
    %v1657 = vpack.c.b16 %v1441, %v1433
    %v1658 = vpack.c.b16 %v1442, %v1434
    %v1659 = vpack.c.b16 %v1443, %v1435
    %v1660 = vpack.c.b16 %v1444, %v1436
    %v1661 = vpack.c.b16 %v1445, %v1437
    %v1662 = vpack.c.b16 %v1454, %v1446
    %v1663 = vpack.c.b16 %v1455, %v1447
    %v1664 = vpack.c.b16 %v1456, %v1448
    %v1665 = vpack.c.b16 %v1457, %v1449
    %v1666 = vpack.c.b16 %v1458, %v1450
    %v1667 = vpack.c.b16 %v1459, %v1451
    %v1668 = vpack.c.b16 %v1460, %v1452
    %v1669 = vpack.c.b16 %v1461, %v1453
    %v1670 = vpack.c.b16 %v1470, %v1462
    %v1671 = vpack.c.b16 %v1471, %v1463
    %v1672 = vpack.c.b16 %v1472, %v1464
    %v1673 = vpack.c.b16 %v1473, %v1465
    %v1674 = vpack.c.b16 %v1474, %v1466
    %v1675 = vpack.c.b16 %v1475, %v1467
    %v1676 = vpack.c.b16 %v1476, %v1468
    %v1677 = vpack.c.b16 %v1477, %v1469
    %v1678 = vpack.c.b16 %v1486, %v1478
    %v1679 = vpack.c.b16 %v1487, %v1479
    %v1680 = vpack.c.b16 %v1488, %v1480
    %v1681 = vpack.c.b16 %v1489, %v1481
    %v1682 = vpack.c.b16 %v1490, %v1482
    %v1683 = vpack.c.b16 %v1491, %v1483
    %v1684 = vpack.c.b16 %v1492, %v1484
    %v1685 = vpack.c.b16 %v1493, %v1485
    %v1686 = vpack.c.b16 %v1502, %v1494
    %v1687 = vpack.c.b16 %v1503, %v1495
    %v1688 = vpack.c.b16 %v1504, %v1496
    %v1689 = vpack.c.b16 %v1505, %v1497
    %v1690 = vpack.c.b16 %v1506, %v1498
    %v1691 = vpack.c.b16 %v1507, %v1499
    %v1692 = vpack.c.b16 %v1508, %v1500
    %v1693 = vpack.c.b16 %v1509, %v1501
    %v1694 = vpack.c.b16 %v1518, %v1510
    %v1695 = vpack.c.b16 %v1519, %v1511
    %v1696 = vpack.c.b16 %v1520, %v1512
    %v1697 = vpack.c.b16 %v1521, %v1513
    %v1698 = vpack.c.b16 %v1522, %v1514
    %v1699 = vpack.c.b16 %v1523, %v1515
    %v1700 = vpack.c.b16 %v1524, %v1516
    %v1701 = vpack.c.b16 %v1525, %v1517
    %v1702 = vpack.c.b16 %v1534, %v1526
    %v1703 = vpack.c.b16 %v1535, %v1527
    %v1704 = vpack.c.b16 %v1536, %v1528
    %v1705 = vpack.c.b16 %v1537, %v1529
    %v1706 = vpack.c.b16 %v1538, %v1530
    %v1707 = vpack.c.b16 %v1539, %v1531
    %v1708 = vpack.c.b16 %v1540, %v1532
    %v1709 = vpack.c.b16 %v1541, %v1533
    %v1710 = vpack.c.b16 %v1550, %v1542
    %v1711 = vpack.c.b16 %v1551, %v1543
    %v1712 = vpack.c.b16 %v1552, %v1544
    %v1713 = vpack.c.b16 %v1553, %v1545
    %v1714 = vpack.c.b16 %v1554, %v1546
    %v1715 = vpack.c.b16 %v1555, %v1547
    %v1716 = vpack.c.b16 %v1556, %v1548
    %v1717 = vpack.c.b16 %v1557, %v1549
    %v1718 = vpack.c.b16 %v1566, %v1558
    %v1719 = vpack.c.b16 %v1567, %v1559
    %v1720 = vpack.c.b16 %v1568, %v1560
    %v1721 = vpack.c.b16 %v1569, %v1561
    %v1722 = vpack.c.b16 %v1570, %v1562
    %v1723 = vpack.c.b16 %v1571, %v1563
    %v1724 = vpack.c.b16 %v1572, %v1564
    %v1725 = vpack.c.b16 %v1573, %v1565
    %v1726 = vpack.c.b16 %v1582, %v1574
    %v1727 = vpack.c.b16 %v1583, %v1575
    %v1728 = vpack.c.b16 %v1584, %v1576
    %v1729 = vpack.c.b16 %v1585, %v1577
    %v1730 = vpack.c.b16 %v1586, %v1578
    %v1731 = vpack.c.b16 %v1587, %v1579
    %v1732 = vpack.c.b16 %v1588, %v1580
    %v1733 = vpack.c.b16 %v1589, %v1581
    %v1734 = vpack.c.b16 %v1598, %v1590
    %v1735 = vpack.c.b16 %v1599, %v1591
    %v1736 = vpack.c.b16 %v1600, %v1592
    %v1737 = vpack.c.b16 %v1601, %v1593
    %v1738 = vpack.c.b16 %v1602, %v1594
    %v1739 = vpack.c.b16 %v1603, %v1595
    %v1740 = vpack.c.b16 %v1604, %v1596
    %v1741 = vpack.c.b16 %v1605, %v1597
    %v1742 = vpack.c.b16 %v1614, %v1606
    %v1743 = vpack.c.b16 %v1615, %v1607
    %v1744 = vpack.c.b16 %v1616, %v1608
    %v1745 = vpack.c.b16 %v1617, %v1609
    %v1746 = vpack.c.b16 %v1618, %v1610
    %v1747 = vpack.c.b16 %v1619, %v1611
    %v1748 = vpack.c.b16 %v1620, %v1612
    %v1749 = vpack.c.b16 %v1621, %v1613
    %1878 = vmatpush.bf16.msra.mxu0 %v1678
    %1879 = vmatpush.bf16.msra.mxu0 %v1670
    %1880 = vmatpush.bf16.msra.mxu0 %v1662
    %1881 = vmatpush.bf16.msra.mxu0 %v1654
    %1882 = vmatpush.bf16.msra.mxu0 %v1646
    %1883 = vmatpush.bf16.msra.mxu0 %v1638
    %1884 = vmatpush.bf16.msra.mxu0 %v1630
    %1885 = vmatpush.bf16.msra.mxu0 %v1622
    %1886 = vmatmul.bf16.gmra.mxu0 %v1234
    %v1887 = vpop.f32.mrf.mxu0
    %v1888 = vadd.f32 %v1046, %v1887
    %v1889 = vpop.f32.mrf.mxu0
    %1890 = vdwg.mxu0
    %1891 = vmatpush.bf16.msra.mxu0 %v1742
    %1892 = vmatpush.bf16.msra.mxu0 %v1734
    %1893 = vmatpush.bf16.msra.mxu0 %v1726
    %1894 = vmatpush.bf16.msra.mxu0 %v1718
    %1895 = vmatpush.bf16.msra.mxu0 %v1710
    %1896 = vmatpush.bf16.msra.mxu0 %v1702
    %1897 = vmatpush.bf16.msra.mxu0 %v1694
    %1898 = vmatpush.bf16.msra.mxu0 %v1686
    %1899 = vmatmul.bf16.gmra.mxu0 %v1235
    %v1900 = vpop.f32.mrf.mxu0
    %v1901 = vadd.f32 %v1888, %v1900
    %v1902 = vpop.f32.mrf.mxu0
    %1903 = vdwg.mxu0
    %1904 = vmatpush.bf16.msra.mxu0 %v1679
    %1905 = vmatpush.bf16.msra.mxu0 %v1671
    %1906 = vmatpush.bf16.msra.mxu0 %v1663
    %1907 = vmatpush.bf16.msra.mxu0 %v1655
    %1908 = vmatpush.bf16.msra.mxu0 %v1647
    %1909 = vmatpush.bf16.msra.mxu0 %v1639
    %1910 = vmatpush.bf16.msra.mxu0 %v1631
    %1911 = vmatpush.bf16.msra.mxu0 %v1623
    %1912 = vmatmul.bf16.gmra.mxu0 %v1234
    %v1913 = vpop.f32.mrf.mxu0
    %v1914 = vadd.f32 %v1072, %v1913
    %v1915 = vpop.f32.mrf.mxu0
    %1916 = vdwg.mxu0
    %1917 = vmatpush.bf16.msra.mxu0 %v1743
    %1918 = vmatpush.bf16.msra.mxu0 %v1735
    %1919 = vmatpush.bf16.msra.mxu0 %v1727
    %1920 = vmatpush.bf16.msra.mxu0 %v1719
    %1921 = vmatpush.bf16.msra.mxu0 %v1711
    %1922 = vmatpush.bf16.msra.mxu0 %v1703
    %1923 = vmatpush.bf16.msra.mxu0 %v1695
    %1924 = vmatpush.bf16.msra.mxu0 %v1687
    %1925 = vmatmul.bf16.gmra.mxu0 %v1235
    %v1926 = vpop.f32.mrf.mxu0
    %v1927 = vadd.f32 %v1914, %v1926
    %v1928 = vpop.f32.mrf.mxu0
    %1929 = vdwg.mxu0
    %1930 = vmatpush.bf16.msra.mxu0 %v1680
    %1931 = vmatpush.bf16.msra.mxu0 %v1672
    %1932 = vmatpush.bf16.msra.mxu0 %v1664
    %1933 = vmatpush.bf16.msra.mxu0 %v1656
    %1934 = vmatpush.bf16.msra.mxu0 %v1648
    %1935 = vmatpush.bf16.msra.mxu0 %v1640
    %1936 = vmatpush.bf16.msra.mxu0 %v1632
    %1937 = vmatpush.bf16.msra.mxu0 %v1624
    %1938 = vmatmul.bf16.gmra.mxu0 %v1234
    %v1939 = vpop.f32.mrf.mxu0
    %v1940 = vadd.f32 %v1098, %v1939
    %v1941 = vpop.f32.mrf.mxu0
    %1942 = vdwg.mxu0
    %1943 = vmatpush.bf16.msra.mxu0 %v1744
    %1944 = vmatpush.bf16.msra.mxu0 %v1736
    %1945 = vmatpush.bf16.msra.mxu0 %v1728
    %1946 = vmatpush.bf16.msra.mxu0 %v1720
    %1947 = vmatpush.bf16.msra.mxu0 %v1712
    %1948 = vmatpush.bf16.msra.mxu0 %v1704
    %1949 = vmatpush.bf16.msra.mxu0 %v1696
    %1950 = vmatpush.bf16.msra.mxu0 %v1688
    %1951 = vmatmul.bf16.gmra.mxu0 %v1235
    %v1952 = vpop.f32.mrf.mxu0
    %v1953 = vadd.f32 %v1940, %v1952
    %v1954 = vpop.f32.mrf.mxu0
    %1955 = vdwg.mxu0
    %1956 = vmatpush.bf16.msra.mxu0 %v1681
    %1957 = vmatpush.bf16.msra.mxu0 %v1673
    %1958 = vmatpush.bf16.msra.mxu0 %v1665
    %1959 = vmatpush.bf16.msra.mxu0 %v1657
    %1960 = vmatpush.bf16.msra.mxu0 %v1649
    %1961 = vmatpush.bf16.msra.mxu0 %v1641
    %1962 = vmatpush.bf16.msra.mxu0 %v1633
    %1963 = vmatpush.bf16.msra.mxu0 %v1625
    %1964 = vmatmul.bf16.gmra.mxu0 %v1234
    %v1965 = vpop.f32.mrf.mxu0
    %v1966 = vadd.f32 %v1124, %v1965
    %v1967 = vpop.f32.mrf.mxu0
    %1968 = vdwg.mxu0
    %1969 = vmatpush.bf16.msra.mxu0 %v1745
    %1970 = vmatpush.bf16.msra.mxu0 %v1737
    %1971 = vmatpush.bf16.msra.mxu0 %v1729
    %1972 = vmatpush.bf16.msra.mxu0 %v1721
    %1973 = vmatpush.bf16.msra.mxu0 %v1713
    %1974 = vmatpush.bf16.msra.mxu0 %v1705
    %1975 = vmatpush.bf16.msra.mxu0 %v1697
    %1976 = vmatpush.bf16.msra.mxu0 %v1689
    %1977 = vmatmul.bf16.gmra.mxu0 %v1235
    %v1978 = vpop.f32.mrf.mxu0
    %v1979 = vadd.f32 %v1966, %v1978
    %v1980 = vpop.f32.mrf.mxu0
    %1981 = vdwg.mxu0
    %1982 = vmatpush.bf16.msra.mxu0 %v1682
    %1983 = vmatpush.bf16.msra.mxu0 %v1674
    %1984 = vmatpush.bf16.msra.mxu0 %v1666
    %1985 = vmatpush.bf16.msra.mxu0 %v1658
    %1986 = vmatpush.bf16.msra.mxu0 %v1650
    %1987 = vmatpush.bf16.msra.mxu0 %v1642
    %1988 = vmatpush.bf16.msra.mxu0 %v1634
    %1989 = vmatpush.bf16.msra.mxu0 %v1626
    %1990 = vmatmul.bf16.gmra.mxu0 %v1234
    %v1991 = vpop.f32.mrf.mxu0
    %v1992 = vadd.f32 %v1150, %v1991
    %v1993 = vpop.f32.mrf.mxu0
    %1994 = vdwg.mxu0
    %1995 = vmatpush.bf16.msra.mxu0 %v1746
    %1996 = vmatpush.bf16.msra.mxu0 %v1738
    %1997 = vmatpush.bf16.msra.mxu0 %v1730
    %1998 = vmatpush.bf16.msra.mxu0 %v1722
    %1999 = vmatpush.bf16.msra.mxu0 %v1714
    %2000 = vmatpush.bf16.msra.mxu0 %v1706
    %2001 = vmatpush.bf16.msra.mxu0 %v1698
    %2002 = vmatpush.bf16.msra.mxu0 %v1690
    %2003 = vmatmul.bf16.gmra.mxu0 %v1235
    %v2004 = vpop.f32.mrf.mxu0
    %v2005 = vadd.f32 %v1992, %v2004
    %v2006 = vpop.f32.mrf.mxu0
    %2007 = vdwg.mxu0
    %2008 = vmatpush.bf16.msra.mxu0 %v1683
    %2009 = vmatpush.bf16.msra.mxu0 %v1675
    %2010 = vmatpush.bf16.msra.mxu0 %v1667
    %2011 = vmatpush.bf16.msra.mxu0 %v1659
    %2012 = vmatpush.bf16.msra.mxu0 %v1651
    %2013 = vmatpush.bf16.msra.mxu0 %v1643
    %2014 = vmatpush.bf16.msra.mxu0 %v1635
    %2015 = vmatpush.bf16.msra.mxu0 %v1627
    %2016 = vmatmul.bf16.gmra.mxu0 %v1234
    %v2017 = vpop.f32.mrf.mxu0
    %v2018 = vadd.f32 %v1176, %v2017
    %v2019 = vpop.f32.mrf.mxu0
    %2020 = vdwg.mxu0
    %2021 = vmatpush.bf16.msra.mxu0 %v1747
    %2022 = vmatpush.bf16.msra.mxu0 %v1739
    %2023 = vmatpush.bf16.msra.mxu0 %v1731
    %2024 = vmatpush.bf16.msra.mxu0 %v1723
    %2025 = vmatpush.bf16.msra.mxu0 %v1715
    %2026 = vmatpush.bf16.msra.mxu0 %v1707
    %2027 = vmatpush.bf16.msra.mxu0 %v1699
    %2028 = vmatpush.bf16.msra.mxu0 %v1691
    %2029 = vmatmul.bf16.gmra.mxu0 %v1235
    %v2030 = vpop.f32.mrf.mxu0
    %v2031 = vadd.f32 %v2018, %v2030
    %v2032 = vpop.f32.mrf.mxu0
    %2033 = vdwg.mxu0
    %2034 = vmatpush.bf16.msra.mxu0 %v1684
    %2035 = vmatpush.bf16.msra.mxu0 %v1676
    %2036 = vmatpush.bf16.msra.mxu0 %v1668
    %2037 = vmatpush.bf16.msra.mxu0 %v1660
    %2038 = vmatpush.bf16.msra.mxu0 %v1652
    %2039 = vmatpush.bf16.msra.mxu0 %v1644
    %2040 = vmatpush.bf16.msra.mxu0 %v1636
    %2041 = vmatpush.bf16.msra.mxu0 %v1628
    %2042 = vmatmul.bf16.gmra.mxu0 %v1234
    %v2043 = vpop.f32.mrf.mxu0
    %v2044 = vadd.f32 %v1202, %v2043
    %v2045 = vpop.f32.mrf.mxu0
    %2046 = vdwg.mxu0
    %2047 = vmatpush.bf16.msra.mxu0 %v1748
    %2048 = vmatpush.bf16.msra.mxu0 %v1740
    %2049 = vmatpush.bf16.msra.mxu0 %v1732
    %2050 = vmatpush.bf16.msra.mxu0 %v1724
    %2051 = vmatpush.bf16.msra.mxu0 %v1716
    %2052 = vmatpush.bf16.msra.mxu0 %v1708
    %2053 = vmatpush.bf16.msra.mxu0 %v1700
    %2054 = vmatpush.bf16.msra.mxu0 %v1692
    %2055 = vmatmul.bf16.gmra.mxu0 %v1235
    %v2056 = vpop.f32.mrf.mxu0
    %v2057 = vadd.f32 %v2044, %v2056
    %v2058 = vpop.f32.mrf.mxu0
    %2059 = vdwg.mxu0
    %2060 = vmatpush.bf16.msra.mxu0 %v1685
    %2061 = vmatpush.bf16.msra.mxu0 %v1677
    %2062 = vmatpush.bf16.msra.mxu0 %v1669
    %2063 = vmatpush.bf16.msra.mxu0 %v1661
    %2064 = vmatpush.bf16.msra.mxu0 %v1653
    %2065 = vmatpush.bf16.msra.mxu0 %v1645
    %2066 = vmatpush.bf16.msra.mxu0 %v1637
    %2067 = vmatpush.bf16.msra.mxu0 %v1629
    %2068 = vmatmul.bf16.gmra.mxu0 %v1234
    %v2069 = vpop.f32.mrf.mxu0
    %v2070 = vadd.f32 %v1228, %v2069
    %v2071 = vpop.f32.mrf.mxu0
    %2072 = vdwg.mxu0
    %2073 = vmatpush.bf16.msra.mxu0 %v1749
    %2074 = vmatpush.bf16.msra.mxu0 %v1741
    %2075 = vmatpush.bf16.msra.mxu0 %v1733
    %2076 = vmatpush.bf16.msra.mxu0 %v1725
    %2077 = vmatpush.bf16.msra.mxu0 %v1717
    %2078 = vmatpush.bf16.msra.mxu0 %v1709
    %2079 = vmatpush.bf16.msra.mxu0 %v1701
    %2080 = vmatpush.bf16.msra.mxu0 %v1693
    %2081 = vmatmul.bf16.gmra.mxu0 %v1235
    %v2082 = vpop.f32.mrf.mxu0
    %v2083 = vadd.f32 %v2070, %v2082
    %v2084 = vpop.f32.mrf.mxu0
    %2085 = vdwg.mxu0
    %v2086 = vld [vmem:[#allocation8] sm:$0xff]
    %v2088 = vperm.slane %v2086, 0
    %v2089 = vperm.slane %v2086, 1
    %v2090 = vperm.slane %v2086, 2
    %v2091 = vperm.slane %v2086, 3
    %v2092 = vperm.slane %v2086, 4
    %v2093 = vperm.slane %v2086, 5
    %v2094 = vperm.slane %v2086, 6
    %v2095 = vperm.slane %v2086, 7
    %v2104 = vadd.f32 %v1901, %v2088
    %v2105 = vadd.f32 %v1927, %v2089
    %v2106 = vadd.f32 %v1953, %v2090
    %v2107 = vadd.f32 %v1979, %v2091
    %v2108 = vadd.f32 %v2005, %v2092
    %v2109 = vadd.f32 %v2031, %v2093
    %v2110 = vadd.f32 %v2057, %v2094
    %v2111 = vadd.f32 %v2083, %v2095
    %v2112 = vmax.f32 %v2104, 0.0
    %v2113 = vmax.f32 %v2105, 0.0
    %v2114 = vmax.f32 %v2106, 0.0
    %v2115 = vmax.f32 %v2107, 0.0
    %v2116 = vmax.f32 %v2108, 0.0
    %v2117 = vmax.f32 %v2109, 0.0
    %v2118 = vmax.f32 %v2110, 0.0
    %v2119 = vmax.f32 %v2111, 0.0
    %v2120 = vpack.c.bf16 %v2112, %v2112
    %v2121 = vpack.c.bf16 %v2113, %v2113
    %v2122 = vpack.c.bf16 %v2114, %v2114
    %v2123 = vpack.c.bf16 %v2115, %v2115
    %v2124 = vpack.c.bf16 %v2116, %v2116
    %v2125 = vpack.c.bf16 %v2117, %v2117
    %v2126 = vpack.c.bf16 %v2118, %v2118
    %v2127 = vpack.c.bf16 %v2119, %v2119
    %v2128 = vld [vmem:[#allocation10] sm:$0xff]
    %v2129 = vld [vmem:[#allocation10 + $0x8] sm:$0xff]
    %v2130 = vld [vmem:[#allocation10 + $0x10] sm:$0xff]
    %v2131 = vld [vmem:[#allocation10 + $0x18] sm:$0xff]
    %v2132 = vld [vmem:[#allocation10 + $0x20] sm:$0xff]
    %v2133 = vld [vmem:[#allocation10 + $0x28] sm:$0xff]
    %v2134 = vld [vmem:[#allocation10 + $0x30] sm:$0xff]
    %v2135 = vld [vmem:[#allocation10 + $0x38] sm:$0xff]
    %v2136 = vld [vmem:[#allocation10 + $0x40] sm:$0xff]
    %v2137 = vld [vmem:[#allocation10 + $0x48] sm:$0xff]
    %v2138 = vld [vmem:[#allocation10 + $0x50] sm:$0xff]
    %v2139 = vld [vmem:[#allocation10 + $0x58] sm:$0xff]
    %v2140 = vld [vmem:[#allocation10 + $0x60] sm:$0xff]
    %v2141 = vld [vmem:[#allocation10 + $0x68] sm:$0xff]
    %v2142 = vld [vmem:[#allocation10 + $0x70] sm:$0xff]
    %v2143 = vld [vmem:[#allocation10 + $0x78] sm:$0xff]
    %v2144 = vld [vmem:[#allocation10 + $0x80] sm:$0xff]
    %v2145 = vld [vmem:[#allocation10 + $0x88] sm:$0xff]
    %v2146 = vld [vmem:[#allocation10 + $0x90] sm:$0xff]
    %v2147 = vld [vmem:[#allocation10 + $0x98] sm:$0xff]
    %v2148 = vld [vmem:[#allocation10 + $0xa0] sm:$0xff]
    %v2149 = vld [vmem:[#allocation10 + $0xa8] sm:$0xff]
    %v2150 = vld [vmem:[#allocation10 + $0xb0] sm:$0xff]
    %v2151 = vld [vmem:[#allocation10 + $0xb8] sm:$0xff]
    %v2152 = vld [vmem:[#allocation10 + $0xc0] sm:$0xff]
    %v2153 = vld [vmem:[#allocation10 + $0xc8] sm:$0xff]
    %v2154 = vld [vmem:[#allocation10 + $0xd0] sm:$0xff]
    %v2155 = vld [vmem:[#allocation10 + $0xd8] sm:$0xff]
    %v2156 = vld [vmem:[#allocation10 + $0xe0] sm:$0xff]
    %v2157 = vld [vmem:[#allocation10 + $0xe8] sm:$0xff]
    %v2158 = vld [vmem:[#allocation10 + $0xf0] sm:$0xff]
    %v2159 = vld [vmem:[#allocation10 + $0xf8] sm:$0xff]
    %v2160 = vld [vmem:[#allocation10 + $0x100] sm:$0xff]
    %v2161 = vld [vmem:[#allocation10 + $0x108] sm:$0xff]
    %v2162 = vld [vmem:[#allocation10 + $0x110] sm:$0xff]
    %v2163 = vld [vmem:[#allocation10 + $0x118] sm:$0xff]
    %v2164 = vld [vmem:[#allocation10 + $0x120] sm:$0xff]
    %v2165 = vld [vmem:[#allocation10 + $0x128] sm:$0xff]
    %v2166 = vld [vmem:[#allocation10 + $0x130] sm:$0xff]
    %v2167 = vld [vmem:[#allocation10 + $0x138] sm:$0xff]
    %v2168 = vld [vmem:[#allocation10 + $0x140] sm:$0xff]
    %v2169 = vld [vmem:[#allocation10 + $0x148] sm:$0xff]
    %v2170 = vld [vmem:[#allocation10 + $0x150] sm:$0xff]
    %v2171 = vld [vmem:[#allocation10 + $0x158] sm:$0xff]
    %v2172 = vld [vmem:[#allocation10 + $0x160] sm:$0xff]
    %v2173 = vld [vmem:[#allocation10 + $0x168] sm:$0xff]
    %v2174 = vld [vmem:[#allocation10 + $0x170] sm:$0xff]
    %v2175 = vld [vmem:[#allocation10 + $0x178] sm:$0xff]
    %v2176 = vld [vmem:[#allocation10 + $0x180] sm:$0xff]
    %v2177 = vld [vmem:[#allocation10 + $0x188] sm:$0xff]
    %v2178 = vld [vmem:[#allocation10 + $0x190] sm:$0xff]
    %v2179 = vld [vmem:[#allocation10 + $0x198] sm:$0xff]
    %v2180 = vld [vmem:[#allocation10 + $0x1a0] sm:$0xff]
    %v2181 = vld [vmem:[#allocation10 + $0x1a8] sm:$0xff]
    %v2182 = vld [vmem:[#allocation10 + $0x1b0] sm:$0xff]
    %v2183 = vld [vmem:[#allocation10 + $0x1b8] sm:$0xff]
    %v2184 = vld [vmem:[#allocation10 + $0x1c0] sm:$0xff]
    %v2185 = vld [vmem:[#allocation10 + $0x1c8] sm:$0xff]
    %v2186 = vld [vmem:[#allocation10 + $0x1d0] sm:$0xff]
    %v2187 = vld [vmem:[#allocation10 + $0x1d8] sm:$0xff]
    %v2188 = vld [vmem:[#allocation10 + $0x1e0] sm:$0xff]
    %v2189 = vld [vmem:[#allocation10 + $0x1e8] sm:$0xff]
    %v2190 = vld [vmem:[#allocation10 + $0x1f0] sm:$0xff]
    %v2191 = vld [vmem:[#allocation10 + $0x1f8] sm:$0xff]
    %v2192 = vld [vmem:[#allocation10 + $0x200] sm:$0xff]
    %v2193 = vld [vmem:[#allocation10 + $0x208] sm:$0xff]
    %v2194 = vld [vmem:[#allocation10 + $0x210] sm:$0xff]
    %v2195 = vld [vmem:[#allocation10 + $0x218] sm:$0xff]
    %v2196 = vld [vmem:[#allocation10 + $0x220] sm:$0xff]
    %v2197 = vld [vmem:[#allocation10 + $0x228] sm:$0xff]
    %v2198 = vld [vmem:[#allocation10 + $0x230] sm:$0xff]
    %v2199 = vld [vmem:[#allocation10 + $0x238] sm:$0xff]
    %v2200 = vld [vmem:[#allocation10 + $0x240] sm:$0xff]
    %v2201 = vld [vmem:[#allocation10 + $0x248] sm:$0xff]
    %v2202 = vld [vmem:[#allocation10 + $0x250] sm:$0xff]
    %v2203 = vld [vmem:[#allocation10 + $0x258] sm:$0xff]
    %v2204 = vld [vmem:[#allocation10 + $0x260] sm:$0xff]
    %v2205 = vld [vmem:[#allocation10 + $0x268] sm:$0xff]
    %v2206 = vld [vmem:[#allocation10 + $0x270] sm:$0xff]
    %v2207 = vld [vmem:[#allocation10 + $0x278] sm:$0xff]
    %v2208 = vld [vmem:[#allocation10 + $0x280] sm:$0xff]
    %v2209 = vld [vmem:[#allocation10 + $0x288] sm:$0xff]
    %v2210 = vld [vmem:[#allocation10 + $0x290] sm:$0xff]
    %v2211 = vld [vmem:[#allocation10 + $0x298] sm:$0xff]
    %v2212 = vld [vmem:[#allocation10 + $0x2a0] sm:$0xff]
    %v2213 = vld [vmem:[#allocation10 + $0x2a8] sm:$0xff]
    %v2214 = vld [vmem:[#allocation10 + $0x2b0] sm:$0xff]
    %v2215 = vld [vmem:[#allocation10 + $0x2b8] sm:$0xff]
    %v2216 = vld [vmem:[#allocation10 + $0x2c0] sm:$0xff]
    %v2217 = vld [vmem:[#allocation10 + $0x2c8] sm:$0xff]
    %v2218 = vld [vmem:[#allocation10 + $0x2d0] sm:$0xff]
    %v2219 = vld [vmem:[#allocation10 + $0x2d8] sm:$0xff]
    %v2220 = vld [vmem:[#allocation10 + $0x2e0] sm:$0xff]
    %v2221 = vld [vmem:[#allocation10 + $0x2e8] sm:$0xff]
    %v2222 = vld [vmem:[#allocation10 + $0x2f0] sm:$0xff]
    %v2223 = vld [vmem:[#allocation10 + $0x2f8] sm:$0xff]
    %v2224 = vld [vmem:[#allocation10 + $0x300] sm:$0xff]
    %v2225 = vld [vmem:[#allocation10 + $0x308] sm:$0xff]
    %v2226 = vld [vmem:[#allocation10 + $0x310] sm:$0xff]
    %v2227 = vld [vmem:[#allocation10 + $0x318] sm:$0xff]
    %v2228 = vld [vmem:[#allocation10 + $0x320] sm:$0xff]
    %v2229 = vld [vmem:[#allocation10 + $0x328] sm:$0xff]
    %v2230 = vld [vmem:[#allocation10 + $0x330] sm:$0xff]
    %v2231 = vld [vmem:[#allocation10 + $0x338] sm:$0xff]
    %v2232 = vld [vmem:[#allocation10 + $0x340] sm:$0xff]
    %v2233 = vld [vmem:[#allocation10 + $0x348] sm:$0xff]
    %v2234 = vld [vmem:[#allocation10 + $0x350] sm:$0xff]
    %v2235 = vld [vmem:[#allocation10 + $0x358] sm:$0xff]
    %v2236 = vld [vmem:[#allocation10 + $0x360] sm:$0xff]
    %v2237 = vld [vmem:[#allocation10 + $0x368] sm:$0xff]
    %v2238 = vld [vmem:[#allocation10 + $0x370] sm:$0xff]
    %v2239 = vld [vmem:[#allocation10 + $0x378] sm:$0xff]
    %v2240 = vld [vmem:[#allocation10 + $0x380] sm:$0xff]
    %v2241 = vld [vmem:[#allocation10 + $0x388] sm:$0xff]
    %v2242 = vld [vmem:[#allocation10 + $0x390] sm:$0xff]
    %v2243 = vld [vmem:[#allocation10 + $0x398] sm:$0xff]
    %v2244 = vld [vmem:[#allocation10 + $0x3a0] sm:$0xff]
    %v2245 = vld [vmem:[#allocation10 + $0x3a8] sm:$0xff]
    %v2246 = vld [vmem:[#allocation10 + $0x3b0] sm:$0xff]
    %v2247 = vld [vmem:[#allocation10 + $0x3b8] sm:$0xff]
    %v2248 = vld [vmem:[#allocation10 + $0x3c0] sm:$0xff]
    %v2249 = vld [vmem:[#allocation10 + $0x3c8] sm:$0xff]
    %v2250 = vld [vmem:[#allocation10 + $0x3d0] sm:$0xff]
    %v2251 = vld [vmem:[#allocation10 + $0x3d8] sm:$0xff]
    %v2252 = vld [vmem:[#allocation10 + $0x3e0] sm:$0xff]
    %v2253 = vld [vmem:[#allocation10 + $0x3e8] sm:$0xff]
    %v2254 = vld [vmem:[#allocation10 + $0x3f0] sm:$0xff]
    %v2255 = vld [vmem:[#allocation10 + $0x3f8] sm:$0xff]
    %v2256 = vld [vmem:[%s5] sm:$0x3]
    %v2258 = vperm.slane %v2256, 0
    %v2259 = vperm.slane %v2256, 1
    %v2390 = vunpack.c.l.b16 %v2128
    %v2391 = vunpack.c.h.b16 %v2128
    %v2392 = vunpack.c.l.b16 %v2129
    %v2393 = vunpack.c.h.b16 %v2129
    %v2394 = vunpack.c.l.b16 %v2130
    %v2395 = vunpack.c.h.b16 %v2130
    %v2396 = vunpack.c.l.b16 %v2131
    %v2397 = vunpack.c.h.b16 %v2131
    %v2398 = vunpack.c.l.b16 %v2132
    %v2399 = vunpack.c.h.b16 %v2132
    %v2400 = vunpack.c.l.b16 %v2133
    %v2401 = vunpack.c.h.b16 %v2133
    %v2402 = vunpack.c.l.b16 %v2134
    %v2403 = vunpack.c.h.b16 %v2134
    %v2404 = vunpack.c.l.b16 %v2135
    %v2405 = vunpack.c.h.b16 %v2135
    %v2406 = vunpack.c.l.b16 %v2136
    %v2407 = vunpack.c.h.b16 %v2136
    %v2408 = vunpack.c.l.b16 %v2137
    %v2409 = vunpack.c.h.b16 %v2137
    %v2410 = vunpack.c.l.b16 %v2138
    %v2411 = vunpack.c.h.b16 %v2138
    %v2412 = vunpack.c.l.b16 %v2139
    %v2413 = vunpack.c.h.b16 %v2139
    %v2414 = vunpack.c.l.b16 %v2140
    %v2415 = vunpack.c.h.b16 %v2140
    %v2416 = vunpack.c.l.b16 %v2141
    %v2417 = vunpack.c.h.b16 %v2141
    %v2418 = vunpack.c.l.b16 %v2142
    %v2419 = vunpack.c.h.b16 %v2142
    %v2420 = vunpack.c.l.b16 %v2143
    %v2421 = vunpack.c.h.b16 %v2143
    %v2422 = vunpack.c.l.b16 %v2144
    %v2423 = vunpack.c.h.b16 %v2144
    %v2424 = vunpack.c.l.b16 %v2145
    %v2425 = vunpack.c.h.b16 %v2145
    %v2426 = vunpack.c.l.b16 %v2146
    %v2427 = vunpack.c.h.b16 %v2146
    %v2428 = vunpack.c.l.b16 %v2147
    %v2429 = vunpack.c.h.b16 %v2147
    %v2430 = vunpack.c.l.b16 %v2148
    %v2431 = vunpack.c.h.b16 %v2148
    %v2432 = vunpack.c.l.b16 %v2149
    %v2433 = vunpack.c.h.b16 %v2149
    %v2434 = vunpack.c.l.b16 %v2150
    %v2435 = vunpack.c.h.b16 %v2150
    %v2436 = vunpack.c.l.b16 %v2151
    %v2437 = vunpack.c.h.b16 %v2151
    %v2438 = vunpack.c.l.b16 %v2152
    %v2439 = vunpack.c.h.b16 %v2152
    %v2440 = vunpack.c.l.b16 %v2153
    %v2441 = vunpack.c.h.b16 %v2153
    %v2442 = vunpack.c.l.b16 %v2154
    %v2443 = vunpack.c.h.b16 %v2154
    %v2444 = vunpack.c.l.b16 %v2155
    %v2445 = vunpack.c.h.b16 %v2155
    %v2446 = vunpack.c.l.b16 %v2156
    %v2447 = vunpack.c.h.b16 %v2156
    %v2448 = vunpack.c.l.b16 %v2157
    %v2449 = vunpack.c.h.b16 %v2157
    %v2450 = vunpack.c.l.b16 %v2158
    %v2451 = vunpack.c.h.b16 %v2158
    %v2452 = vunpack.c.l.b16 %v2159
    %v2453 = vunpack.c.h.b16 %v2159
    %v2454 = vunpack.c.l.b16 %v2160
    %v2455 = vunpack.c.h.b16 %v2160
    %v2456 = vunpack.c.l.b16 %v2161
    %v2457 = vunpack.c.h.b16 %v2161
    %v2458 = vunpack.c.l.b16 %v2162
    %v2459 = vunpack.c.h.b16 %v2162
    %v2460 = vunpack.c.l.b16 %v2163
    %v2461 = vunpack.c.h.b16 %v2163
    %v2462 = vunpack.c.l.b16 %v2164
    %v2463 = vunpack.c.h.b16 %v2164
    %v2464 = vunpack.c.l.b16 %v2165
    %v2465 = vunpack.c.h.b16 %v2165
    %v2466 = vunpack.c.l.b16 %v2166
    %v2467 = vunpack.c.h.b16 %v2166
    %v2468 = vunpack.c.l.b16 %v2167
    %v2469 = vunpack.c.h.b16 %v2167
    %v2470 = vunpack.c.l.b16 %v2168
    %v2471 = vunpack.c.h.b16 %v2168
    %v2472 = vunpack.c.l.b16 %v2169
    %v2473 = vunpack.c.h.b16 %v2169
    %v2474 = vunpack.c.l.b16 %v2170
    %v2475 = vunpack.c.h.b16 %v2170
    %v2476 = vunpack.c.l.b16 %v2171
    %v2477 = vunpack.c.h.b16 %v2171
    %v2478 = vunpack.c.l.b16 %v2172
    %v2479 = vunpack.c.h.b16 %v2172
    %v2480 = vunpack.c.l.b16 %v2173
    %v2481 = vunpack.c.h.b16 %v2173
    %v2482 = vunpack.c.l.b16 %v2174
    %v2483 = vunpack.c.h.b16 %v2174
    %v2484 = vunpack.c.l.b16 %v2175
    %v2485 = vunpack.c.h.b16 %v2175
    %v2486 = vunpack.c.l.b16 %v2176
    %v2487 = vunpack.c.h.b16 %v2176
    %v2488 = vunpack.c.l.b16 %v2177
    %v2489 = vunpack.c.h.b16 %v2177
    %v2490 = vunpack.c.l.b16 %v2178
    %v2491 = vunpack.c.h.b16 %v2178
    %v2492 = vunpack.c.l.b16 %v2179
    %v2493 = vunpack.c.h.b16 %v2179
    %v2494 = vunpack.c.l.b16 %v2180
    %v2495 = vunpack.c.h.b16 %v2180
    %v2496 = vunpack.c.l.b16 %v2181
    %v2497 = vunpack.c.h.b16 %v2181
    %v2498 = vunpack.c.l.b16 %v2182
    %v2499 = vunpack.c.h.b16 %v2182
    %v2500 = vunpack.c.l.b16 %v2183
    %v2501 = vunpack.c.h.b16 %v2183
    %v2502 = vunpack.c.l.b16 %v2184
    %v2503 = vunpack.c.h.b16 %v2184
    %v2504 = vunpack.c.l.b16 %v2185
    %v2505 = vunpack.c.h.b16 %v2185
    %v2506 = vunpack.c.l.b16 %v2186
    %v2507 = vunpack.c.h.b16 %v2186
    %v2508 = vunpack.c.l.b16 %v2187
    %v2509 = vunpack.c.h.b16 %v2187
    %v2510 = vunpack.c.l.b16 %v2188
    %v2511 = vunpack.c.h.b16 %v2188
    %v2512 = vunpack.c.l.b16 %v2189
    %v2513 = vunpack.c.h.b16 %v2189
    %v2514 = vunpack.c.l.b16 %v2190
    %v2515 = vunpack.c.h.b16 %v2190
    %v2516 = vunpack.c.l.b16 %v2191
    %v2517 = vunpack.c.h.b16 %v2191
    %v2518 = vunpack.c.l.b16 %v2192
    %v2519 = vunpack.c.h.b16 %v2192
    %v2520 = vunpack.c.l.b16 %v2193
    %v2521 = vunpack.c.h.b16 %v2193
    %v2522 = vunpack.c.l.b16 %v2194
    %v2523 = vunpack.c.h.b16 %v2194
    %v2524 = vunpack.c.l.b16 %v2195
    %v2525 = vunpack.c.h.b16 %v2195
    %v2526 = vunpack.c.l.b16 %v2196
    %v2527 = vunpack.c.h.b16 %v2196
    %v2528 = vunpack.c.l.b16 %v2197
    %v2529 = vunpack.c.h.b16 %v2197
    %v2530 = vunpack.c.l.b16 %v2198
    %v2531 = vunpack.c.h.b16 %v2198
    %v2532 = vunpack.c.l.b16 %v2199
    %v2533 = vunpack.c.h.b16 %v2199
    %v2534 = vunpack.c.l.b16 %v2200
    %v2535 = vunpack.c.h.b16 %v2200
    %v2536 = vunpack.c.l.b16 %v2201
    %v2537 = vunpack.c.h.b16 %v2201
    %v2538 = vunpack.c.l.b16 %v2202
    %v2539 = vunpack.c.h.b16 %v2202
    %v2540 = vunpack.c.l.b16 %v2203
    %v2541 = vunpack.c.h.b16 %v2203
    %v2542 = vunpack.c.l.b16 %v2204
    %v2543 = vunpack.c.h.b16 %v2204
    %v2544 = vunpack.c.l.b16 %v2205
    %v2545 = vunpack.c.h.b16 %v2205
    %v2546 = vunpack.c.l.b16 %v2206
    %v2547 = vunpack.c.h.b16 %v2206
    %v2548 = vunpack.c.l.b16 %v2207
    %v2549 = vunpack.c.h.b16 %v2207
    %v2550 = vunpack.c.l.b16 %v2208
    %v2551 = vunpack.c.h.b16 %v2208
    %v2552 = vunpack.c.l.b16 %v2209
    %v2553 = vunpack.c.h.b16 %v2209
    %v2554 = vunpack.c.l.b16 %v2210
    %v2555 = vunpack.c.h.b16 %v2210
    %v2556 = vunpack.c.l.b16 %v2211
    %v2557 = vunpack.c.h.b16 %v2211
    %v2558 = vunpack.c.l.b16 %v2212
    %v2559 = vunpack.c.h.b16 %v2212
    %v2560 = vunpack.c.l.b16 %v2213
    %v2561 = vunpack.c.h.b16 %v2213
    %v2562 = vunpack.c.l.b16 %v2214
    %v2563 = vunpack.c.h.b16 %v2214
    %v2564 = vunpack.c.l.b16 %v2215
    %v2565 = vunpack.c.h.b16 %v2215
    %v2566 = vunpack.c.l.b16 %v2216
    %v2567 = vunpack.c.h.b16 %v2216
    %v2568 = vunpack.c.l.b16 %v2217
    %v2569 = vunpack.c.h.b16 %v2217
    %v2570 = vunpack.c.l.b16 %v2218
    %v2571 = vunpack.c.h.b16 %v2218
    %v2572 = vunpack.c.l.b16 %v2219
    %v2573 = vunpack.c.h.b16 %v2219
    %v2574 = vunpack.c.l.b16 %v2220
    %v2575 = vunpack.c.h.b16 %v2220
    %v2576 = vunpack.c.l.b16 %v2221
    %v2577 = vunpack.c.h.b16 %v2221
    %v2578 = vunpack.c.l.b16 %v2222
    %v2579 = vunpack.c.h.b16 %v2222
    %v2580 = vunpack.c.l.b16 %v2223
    %v2581 = vunpack.c.h.b16 %v2223
    %v2582 = vunpack.c.l.b16 %v2224
    %v2583 = vunpack.c.h.b16 %v2224
    %v2584 = vunpack.c.l.b16 %v2225
    %v2585 = vunpack.c.h.b16 %v2225
    %v2586 = vunpack.c.l.b16 %v2226
    %v2587 = vunpack.c.h.b16 %v2226
    %v2588 = vunpack.c.l.b16 %v2227
    %v2589 = vunpack.c.h.b16 %v2227
    %v2590 = vunpack.c.l.b16 %v2228
    %v2591 = vunpack.c.h.b16 %v2228
    %v2592 = vunpack.c.l.b16 %v2229
    %v2593 = vunpack.c.h.b16 %v2229
    %v2594 = vunpack.c.l.b16 %v2230
    %v2595 = vunpack.c.h.b16 %v2230
    %v2596 = vunpack.c.l.b16 %v2231
    %v2597 = vunpack.c.h.b16 %v2231
    %v2598 = vunpack.c.l.b16 %v2232
    %v2599 = vunpack.c.h.b16 %v2232
    %v2600 = vunpack.c.l.b16 %v2233
    %v2601 = vunpack.c.h.b16 %v2233
    %v2602 = vunpack.c.l.b16 %v2234
    %v2603 = vunpack.c.h.b16 %v2234
    %v2604 = vunpack.c.l.b16 %v2235
    %v2605 = vunpack.c.h.b16 %v2235
    %v2606 = vunpack.c.l.b16 %v2236
    %v2607 = vunpack.c.h.b16 %v2236
    %v2608 = vunpack.c.l.b16 %v2237
    %v2609 = vunpack.c.h.b16 %v2237
    %v2610 = vunpack.c.l.b16 %v2238
    %v2611 = vunpack.c.h.b16 %v2238
    %v2612 = vunpack.c.l.b16 %v2239
    %v2613 = vunpack.c.h.b16 %v2239
    %v2614 = vunpack.c.l.b16 %v2240
    %v2615 = vunpack.c.h.b16 %v2240
    %v2616 = vunpack.c.l.b16 %v2241
    %v2617 = vunpack.c.h.b16 %v2241
    %v2618 = vunpack.c.l.b16 %v2242
    %v2619 = vunpack.c.h.b16 %v2242
    %v2620 = vunpack.c.l.b16 %v2243
    %v2621 = vunpack.c.h.b16 %v2243
    %v2622 = vunpack.c.l.b16 %v2244
    %v2623 = vunpack.c.h.b16 %v2244
    %v2624 = vunpack.c.l.b16 %v2245
    %v2625 = vunpack.c.h.b16 %v2245
    %v2626 = vunpack.c.l.b16 %v2246
    %v2627 = vunpack.c.h.b16 %v2246
    %v2628 = vunpack.c.l.b16 %v2247
    %v2629 = vunpack.c.h.b16 %v2247
    %v2630 = vunpack.c.l.b16 %v2248
    %v2631 = vunpack.c.h.b16 %v2248
    %v2632 = vunpack.c.l.b16 %v2249
    %v2633 = vunpack.c.h.b16 %v2249
    %v2634 = vunpack.c.l.b16 %v2250
    %v2635 = vunpack.c.h.b16 %v2250
    %v2636 = vunpack.c.l.b16 %v2251
    %v2637 = vunpack.c.h.b16 %v2251
    %v2638 = vunpack.c.l.b16 %v2252
    %v2639 = vunpack.c.h.b16 %v2252
    %v2640 = vunpack.c.l.b16 %v2253
    %v2641 = vunpack.c.h.b16 %v2253
    %v2642 = vunpack.c.l.b16 %v2254
    %v2643 = vunpack.c.h.b16 %v2254
    %v2644 = vunpack.c.l.b16 %v2255
    %v2645 = vunpack.c.h.b16 %v2255
    %v2646 = vpack.c.b16 %v2392, %v2390
    %v2647 = vpack.c.b16 %v2393, %v2391
    %v2648 = vpack.c.b16 %v2396, %v2394
    %v2649 = vpack.c.b16 %v2397, %v2395
    %v2650 = vpack.c.b16 %v2400, %v2398
    %v2651 = vpack.c.b16 %v2401, %v2399
    %v2652 = vpack.c.b16 %v2404, %v2402
    %v2653 = vpack.c.b16 %v2405, %v2403
    %v2654 = vpack.c.b16 %v2408, %v2406
    %v2655 = vpack.c.b16 %v2409, %v2407
    %v2656 = vpack.c.b16 %v2412, %v2410
    %v2657 = vpack.c.b16 %v2413, %v2411
    %v2658 = vpack.c.b16 %v2416, %v2414
    %v2659 = vpack.c.b16 %v2417, %v2415
    %v2660 = vpack.c.b16 %v2420, %v2418
    %v2661 = vpack.c.b16 %v2421, %v2419
    %v2662 = vpack.c.b16 %v2424, %v2422
    %v2663 = vpack.c.b16 %v2425, %v2423
    %v2664 = vpack.c.b16 %v2428, %v2426
    %v2665 = vpack.c.b16 %v2429, %v2427
    %v2666 = vpack.c.b16 %v2432, %v2430
    %v2667 = vpack.c.b16 %v2433, %v2431
    %v2668 = vpack.c.b16 %v2436, %v2434
    %v2669 = vpack.c.b16 %v2437, %v2435
    %v2670 = vpack.c.b16 %v2440, %v2438
    %v2671 = vpack.c.b16 %v2441, %v2439
    %v2672 = vpack.c.b16 %v2444, %v2442
    %v2673 = vpack.c.b16 %v2445, %v2443
    %v2674 = vpack.c.b16 %v2448, %v2446
    %v2675 = vpack.c.b16 %v2449, %v2447
    %v2676 = vpack.c.b16 %v2452, %v2450
    %v2677 = vpack.c.b16 %v2453, %v2451
    %v2678 = vpack.c.b16 %v2456, %v2454
    %v2679 = vpack.c.b16 %v2457, %v2455
    %v2680 = vpack.c.b16 %v2460, %v2458
    %v2681 = vpack.c.b16 %v2461, %v2459
    %v2682 = vpack.c.b16 %v2464, %v2462
    %v2683 = vpack.c.b16 %v2465, %v2463
    %v2684 = vpack.c.b16 %v2468, %v2466
    %v2685 = vpack.c.b16 %v2469, %v2467
    %v2686 = vpack.c.b16 %v2472, %v2470
    %v2687 = vpack.c.b16 %v2473, %v2471
    %v2688 = vpack.c.b16 %v2476, %v2474
    %v2689 = vpack.c.b16 %v2477, %v2475
    %v2690 = vpack.c.b16 %v2480, %v2478
    %v2691 = vpack.c.b16 %v2481, %v2479
    %v2692 = vpack.c.b16 %v2484, %v2482
    %v2693 = vpack.c.b16 %v2485, %v2483
    %v2694 = vpack.c.b16 %v2488, %v2486
    %v2695 = vpack.c.b16 %v2489, %v2487
    %v2696 = vpack.c.b16 %v2492, %v2490
    %v2697 = vpack.c.b16 %v2493, %v2491
    %v2698 = vpack.c.b16 %v2496, %v2494
    %v2699 = vpack.c.b16 %v2497, %v2495
    %v2700 = vpack.c.b16 %v2500, %v2498
    %v2701 = vpack.c.b16 %v2501, %v2499
    %v2702 = vpack.c.b16 %v2504, %v2502
    %v2703 = vpack.c.b16 %v2505, %v2503
    %v2704 = vpack.c.b16 %v2508, %v2506
    %v2705 = vpack.c.b16 %v2509, %v2507
    %v2706 = vpack.c.b16 %v2512, %v2510
    %v2707 = vpack.c.b16 %v2513, %v2511
    %v2708 = vpack.c.b16 %v2516, %v2514
    %v2709 = vpack.c.b16 %v2517, %v2515
    %v2710 = vpack.c.b16 %v2520, %v2518
    %v2711 = vpack.c.b16 %v2521, %v2519
    %v2712 = vpack.c.b16 %v2524, %v2522
    %v2713 = vpack.c.b16 %v2525, %v2523
    %v2714 = vpack.c.b16 %v2528, %v2526
    %v2715 = vpack.c.b16 %v2529, %v2527
    %v2716 = vpack.c.b16 %v2532, %v2530
    %v2717 = vpack.c.b16 %v2533, %v2531
    %v2718 = vpack.c.b16 %v2536, %v2534
    %v2719 = vpack.c.b16 %v2537, %v2535
    %v2720 = vpack.c.b16 %v2540, %v2538
    %v2721 = vpack.c.b16 %v2541, %v2539
    %v2722 = vpack.c.b16 %v2544, %v2542
    %v2723 = vpack.c.b16 %v2545, %v2543
    %v2724 = vpack.c.b16 %v2548, %v2546
    %v2725 = vpack.c.b16 %v2549, %v2547
    %v2726 = vpack.c.b16 %v2552, %v2550
    %v2727 = vpack.c.b16 %v2553, %v2551
    %v2728 = vpack.c.b16 %v2556, %v2554
    %v2729 = vpack.c.b16 %v2557, %v2555
    %v2730 = vpack.c.b16 %v2560, %v2558
    %v2731 = vpack.c.b16 %v2561, %v2559
    %v2732 = vpack.c.b16 %v2564, %v2562
    %v2733 = vpack.c.b16 %v2565, %v2563
    %v2734 = vpack.c.b16 %v2568, %v2566
    %v2735 = vpack.c.b16 %v2569, %v2567
    %v2736 = vpack.c.b16 %v2572, %v2570
    %v2737 = vpack.c.b16 %v2573, %v2571
    %v2738 = vpack.c.b16 %v2576, %v2574
    %v2739 = vpack.c.b16 %v2577, %v2575
    %v2740 = vpack.c.b16 %v2580, %v2578
    %v2741 = vpack.c.b16 %v2581, %v2579
    %v2742 = vpack.c.b16 %v2584, %v2582
    %v2743 = vpack.c.b16 %v2585, %v2583
    %v2744 = vpack.c.b16 %v2588, %v2586
    %v2745 = vpack.c.b16 %v2589, %v2587
    %v2746 = vpack.c.b16 %v2592, %v2590
    %v2747 = vpack.c.b16 %v2593, %v2591
    %v2748 = vpack.c.b16 %v2596, %v2594
    %v2749 = vpack.c.b16 %v2597, %v2595
    %v2750 = vpack.c.b16 %v2600, %v2598
    %v2751 = vpack.c.b16 %v2601, %v2599
    %v2752 = vpack.c.b16 %v2604, %v2602
    %v2753 = vpack.c.b16 %v2605, %v2603
    %v2754 = vpack.c.b16 %v2608, %v2606
    %v2755 = vpack.c.b16 %v2609, %v2607
    %v2756 = vpack.c.b16 %v2612, %v2610
    %v2757 = vpack.c.b16 %v2613, %v2611
    %v2758 = vpack.c.b16 %v2616, %v2614
    %v2759 = vpack.c.b16 %v2617, %v2615
    %v2760 = vpack.c.b16 %v2620, %v2618
    %v2761 = vpack.c.b16 %v2621, %v2619
    %v2762 = vpack.c.b16 %v2624, %v2622
    %v2763 = vpack.c.b16 %v2625, %v2623
    %v2764 = vpack.c.b16 %v2628, %v2626
    %v2765 = vpack.c.b16 %v2629, %v2627
    %v2766 = vpack.c.b16 %v2632, %v2630
    %v2767 = vpack.c.b16 %v2633, %v2631
    %v2768 = vpack.c.b16 %v2636, %v2634
    %v2769 = vpack.c.b16 %v2637, %v2635
    %v2770 = vpack.c.b16 %v2640, %v2638
    %v2771 = vpack.c.b16 %v2641, %v2639
    %v2772 = vpack.c.b16 %v2644, %v2642
    %v2773 = vpack.c.b16 %v2645, %v2643
    %2902 = vmatpush.bf16.msra.mxu0 %v2660
    %2903 = vmatpush.bf16.msra.mxu0 %v2658
    %2904 = vmatpush.bf16.msra.mxu0 %v2656
    %2905 = vmatpush.bf16.msra.mxu0 %v2654
    %2906 = vmatpush.bf16.msra.mxu0 %v2652
    %2907 = vmatpush.bf16.msra.mxu0 %v2650
    %2908 = vmatpush.bf16.msra.mxu0 %v2648
    %2909 = vmatpush.bf16.msra.mxu0 %v2646
    %2910 = vmatmul.bf16.gmra.mxu0 %v2120
    %v2911 = vpop.f32.mrf.mxu0
    %v2912 = vadd.f32 %v2258, %v2911
    %v2913 = vpop.f32.mrf.mxu0
    %2914 = vdwg.mxu0
    %2915 = vmatpush.bf16.msra.mxu0 %v2676
    %2916 = vmatpush.bf16.msra.mxu0 %v2674
    %2917 = vmatpush.bf16.msra.mxu0 %v2672
    %2918 = vmatpush.bf16.msra.mxu0 %v2670
    %2919 = vmatpush.bf16.msra.mxu0 %v2668
    %2920 = vmatpush.bf16.msra.mxu0 %v2666
    %2921 = vmatpush.bf16.msra.mxu0 %v2664
    %2922 = vmatpush.bf16.msra.mxu0 %v2662
    %2923 = vmatmul.bf16.gmra.mxu0 %v2121
    %v2924 = vpop.f32.mrf.mxu0
    %v2925 = vadd.f32 %v2912, %v2924
    %v2926 = vpop.f32.mrf.mxu0
    %2927 = vdwg.mxu0
    %2928 = vmatpush.bf16.msra.mxu0 %v2692
    %2929 = vmatpush.bf16.msra.mxu0 %v2690
    %2930 = vmatpush.bf16.msra.mxu0 %v2688
    %2931 = vmatpush.bf16.msra.mxu0 %v2686
    %2932 = vmatpush.bf16.msra.mxu0 %v2684
    %2933 = vmatpush.bf16.msra.mxu0 %v2682
    %2934 = vmatpush.bf16.msra.mxu0 %v2680
    %2935 = vmatpush.bf16.msra.mxu0 %v2678
    %2936 = vmatmul.bf16.gmra.mxu0 %v2122
    %v2937 = vpop.f32.mrf.mxu0
    %v2938 = vadd.f32 %v2925, %v2937
    %v2939 = vpop.f32.mrf.mxu0
    %2940 = vdwg.mxu0
    %2941 = vmatpush.bf16.msra.mxu0 %v2708
    %2942 = vmatpush.bf16.msra.mxu0 %v2706
    %2943 = vmatpush.bf16.msra.mxu0 %v2704
    %2944 = vmatpush.bf16.msra.mxu0 %v2702
    %2945 = vmatpush.bf16.msra.mxu0 %v2700
    %2946 = vmatpush.bf16.msra.mxu0 %v2698
    %2947 = vmatpush.bf16.msra.mxu0 %v2696
    %2948 = vmatpush.bf16.msra.mxu0 %v2694
    %2949 = vmatmul.bf16.gmra.mxu0 %v2123
    %v2950 = vpop.f32.mrf.mxu0
    %v2951 = vadd.f32 %v2938, %v2950
    %v2952 = vpop.f32.mrf.mxu0
    %2953 = vdwg.mxu0
    %2954 = vmatpush.bf16.msra.mxu0 %v2724
    %2955 = vmatpush.bf16.msra.mxu0 %v2722
    %2956 = vmatpush.bf16.msra.mxu0 %v2720
    %2957 = vmatpush.bf16.msra.mxu0 %v2718
    %2958 = vmatpush.bf16.msra.mxu0 %v2716
    %2959 = vmatpush.bf16.msra.mxu0 %v2714
    %2960 = vmatpush.bf16.msra.mxu0 %v2712
    %2961 = vmatpush.bf16.msra.mxu0 %v2710
    %2962 = vmatmul.bf16.gmra.mxu0 %v2124
    %v2963 = vpop.f32.mrf.mxu0
    %v2964 = vadd.f32 %v2951, %v2963
    %v2965 = vpop.f32.mrf.mxu0
    %2966 = vdwg.mxu0
    %2967 = vmatpush.bf16.msra.mxu0 %v2740
    %2968 = vmatpush.bf16.msra.mxu0 %v2738
    %2969 = vmatpush.bf16.msra.mxu0 %v2736
    %2970 = vmatpush.bf16.msra.mxu0 %v2734
    %2971 = vmatpush.bf16.msra.mxu0 %v2732
    %2972 = vmatpush.bf16.msra.mxu0 %v2730
    %2973 = vmatpush.bf16.msra.mxu0 %v2728
    %2974 = vmatpush.bf16.msra.mxu0 %v2726
    %2975 = vmatmul.bf16.gmra.mxu0 %v2125
    %v2976 = vpop.f32.mrf.mxu0
    %v2977 = vadd.f32 %v2964, %v2976
    %v2978 = vpop.f32.mrf.mxu0
    %2979 = vdwg.mxu0
    %2980 = vmatpush.bf16.msra.mxu0 %v2756
    %2981 = vmatpush.bf16.msra.mxu0 %v2754
    %2982 = vmatpush.bf16.msra.mxu0 %v2752
    %2983 = vmatpush.bf16.msra.mxu0 %v2750
    %2984 = vmatpush.bf16.msra.mxu0 %v2748
    %2985 = vmatpush.bf16.msra.mxu0 %v2746
    %2986 = vmatpush.bf16.msra.mxu0 %v2744
    %2987 = vmatpush.bf16.msra.mxu0 %v2742
    %2988 = vmatmul.bf16.gmra.mxu0 %v2126
    %v2989 = vpop.f32.mrf.mxu0
    %v2990 = vadd.f32 %v2977, %v2989
    %v2991 = vpop.f32.mrf.mxu0
    %2992 = vdwg.mxu0
    %2993 = vmatpush.bf16.msra.mxu0 %v2772
    %2994 = vmatpush.bf16.msra.mxu0 %v2770
    %2995 = vmatpush.bf16.msra.mxu0 %v2768
    %2996 = vmatpush.bf16.msra.mxu0 %v2766
    %2997 = vmatpush.bf16.msra.mxu0 %v2764
    %2998 = vmatpush.bf16.msra.mxu0 %v2762
    %2999 = vmatpush.bf16.msra.mxu0 %v2760
    %3000 = vmatpush.bf16.msra.mxu0 %v2758
    %3001 = vmatmul.bf16.gmra.mxu0 %v2127
    %v3002 = vpop.f32.mrf.mxu0
    %v3003 = vadd.f32 %v2990, %v3002
    %v3004 = vpop.f32.mrf.mxu0
    %3005 = vdwg.mxu0
    %3006 = vmatpush.bf16.msra.mxu0 %v2661
    %3007 = vmatpush.bf16.msra.mxu0 %v2659
    %3008 = vmatpush.bf16.msra.mxu0 %v2657
    %3009 = vmatpush.bf16.msra.mxu0 %v2655
    %3010 = vmatpush.bf16.msra.mxu0 %v2653
    %3011 = vmatpush.bf16.msra.mxu0 %v2651
    %3012 = vmatpush.bf16.msra.mxu0 %v2649
    %3013 = vmatpush.bf16.msra.mxu0 %v2647
    %3014 = vmatmul.bf16.gmra.mxu0 %v2120
    %v3015 = vpop.f32.mrf.mxu0
    %v3016 = vadd.f32 %v2259, %v3015
    %v3017 = vpop.f32.mrf.mxu0
    %3018 = vdwg.mxu0
    %3019 = vmatpush.bf16.msra.mxu0 %v2677
    %3020 = vmatpush.bf16.msra.mxu0 %v2675
    %3021 = vmatpush.bf16.msra.mxu0 %v2673
    %3022 = vmatpush.bf16.msra.mxu0 %v2671
    %3023 = vmatpush.bf16.msra.mxu0 %v2669
    %3024 = vmatpush.bf16.msra.mxu0 %v2667
    %3025 = vmatpush.bf16.msra.mxu0 %v2665
    %3026 = vmatpush.bf16.msra.mxu0 %v2663
    %3027 = vmatmul.bf16.gmra.mxu0 %v2121
    %v3028 = vpop.f32.mrf.mxu0
    %v3029 = vadd.f32 %v3016, %v3028
    %v3030 = vpop.f32.mrf.mxu0
    %3031 = vdwg.mxu0
    %3032 = vmatpush.bf16.msra.mxu0 %v2693
    %3033 = vmatpush.bf16.msra.mxu0 %v2691
    %3034 = vmatpush.bf16.msra.mxu0 %v2689
    %3035 = vmatpush.bf16.msra.mxu0 %v2687
    %3036 = vmatpush.bf16.msra.mxu0 %v2685
    %3037 = vmatpush.bf16.msra.mxu0 %v2683
    %3038 = vmatpush.bf16.msra.mxu0 %v2681
    %3039 = vmatpush.bf16.msra.mxu0 %v2679
    %3040 = vmatmul.bf16.gmra.mxu0 %v2122
    %v3041 = vpop.f32.mrf.mxu0
    %v3042 = vadd.f32 %v3029, %v3041
    %v3043 = vpop.f32.mrf.mxu0
    %3044 = vdwg.mxu0
    %3045 = vmatpush.bf16.msra.mxu0 %v2709
    %3046 = vmatpush.bf16.msra.mxu0 %v2707
    %3047 = vmatpush.bf16.msra.mxu0 %v2705
    %3048 = vmatpush.bf16.msra.mxu0 %v2703
    %3049 = vmatpush.bf16.msra.mxu0 %v2701
    %3050 = vmatpush.bf16.msra.mxu0 %v2699
    %3051 = vmatpush.bf16.msra.mxu0 %v2697
    %3052 = vmatpush.bf16.msra.mxu0 %v2695
    %3053 = vmatmul.bf16.gmra.mxu0 %v2123
    %v3054 = vpop.f32.mrf.mxu0
    %v3055 = vadd.f32 %v3042, %v3054
    %v3056 = vpop.f32.mrf.mxu0
    %3057 = vdwg.mxu0
    %3058 = vmatpush.bf16.msra.mxu0 %v2725
    %3059 = vmatpush.bf16.msra.mxu0 %v2723
    %3060 = vmatpush.bf16.msra.mxu0 %v2721
    %3061 = vmatpush.bf16.msra.mxu0 %v2719
    %3062 = vmatpush.bf16.msra.mxu0 %v2717
    %3063 = vmatpush.bf16.msra.mxu0 %v2715
    %3064 = vmatpush.bf16.msra.mxu0 %v2713
    %3065 = vmatpush.bf16.msra.mxu0 %v2711
    %3066 = vmatmul.bf16.gmra.mxu0 %v2124
    %v3067 = vpop.f32.mrf.mxu0
    %v3068 = vadd.f32 %v3055, %v3067
    %v3069 = vpop.f32.mrf.mxu0
    %3070 = vdwg.mxu0
    %3071 = vmatpush.bf16.msra.mxu0 %v2741
    %3072 = vmatpush.bf16.msra.mxu0 %v2739
    %3073 = vmatpush.bf16.msra.mxu0 %v2737
    %3074 = vmatpush.bf16.msra.mxu0 %v2735
    %3075 = vmatpush.bf16.msra.mxu0 %v2733
    %3076 = vmatpush.bf16.msra.mxu0 %v2731
    %3077 = vmatpush.bf16.msra.mxu0 %v2729
    %3078 = vmatpush.bf16.msra.mxu0 %v2727
    %3079 = vmatmul.bf16.gmra.mxu0 %v2125
    %v3080 = vpop.f32.mrf.mxu0
    %v3081 = vadd.f32 %v3068, %v3080
    %v3082 = vpop.f32.mrf.mxu0
    %3083 = vdwg.mxu0
    %3084 = vmatpush.bf16.msra.mxu0 %v2757
    %3085 = vmatpush.bf16.msra.mxu0 %v2755
    %3086 = vmatpush.bf16.msra.mxu0 %v2753
    %3087 = vmatpush.bf16.msra.mxu0 %v2751
    %3088 = vmatpush.bf16.msra.mxu0 %v2749
    %3089 = vmatpush.bf16.msra.mxu0 %v2747
    %3090 = vmatpush.bf16.msra.mxu0 %v2745
    %3091 = vmatpush.bf16.msra.mxu0 %v2743
    %3092 = vmatmul.bf16.gmra.mxu0 %v2126
    %v3093 = vpop.f32.mrf.mxu0
    %v3094 = vadd.f32 %v3081, %v3093
    %v3095 = vpop.f32.mrf.mxu0
    %3096 = vdwg.mxu0
    %3097 = vmatpush.bf16.msra.mxu0 %v2773
    %3098 = vmatpush.bf16.msra.mxu0 %v2771
    %3099 = vmatpush.bf16.msra.mxu0 %v2769
    %3100 = vmatpush.bf16.msra.mxu0 %v2767
    %3101 = vmatpush.bf16.msra.mxu0 %v2765
    %3102 = vmatpush.bf16.msra.mxu0 %v2763
    %3103 = vmatpush.bf16.msra.mxu0 %v2761
    %3104 = vmatpush.bf16.msra.mxu0 %v2759
    %3105 = vmatmul.bf16.gmra.mxu0 %v2127
    %v3106 = vpop.f32.mrf.mxu0
    %v3107 = vadd.f32 %v3094, %v3106
    %v3108 = vpop.f32.mrf.mxu0
    %3109 = vdwg.mxu0
    %v3110 = vmax.f32 %v3003, 0.0
    %v3111 = vmax.f32 %v3107, 0.0
    %v3112 = vpack.c.bf16 %v3110, %v3110
    %v3113 = vpack.c.bf16 %v3111, %v3111
    %v3114 = vld [vmem:[#allocation11] sm:$0xf]
    %v3115 = vld [vmem:[#allocation11 + $0x4] sm:$0xf]
    %v3116 = vld [vmem:[#allocation11 + $0x8] sm:$0xf]
    %v3117 = vld [vmem:[#allocation11 + $0xc] sm:$0xf]
    %v3118 = vld [vmem:[#allocation11 + $0x10] sm:$0xf]
    %v3119 = vld [vmem:[#allocation11 + $0x14] sm:$0xf]
    %v3120 = vld [vmem:[#allocation11 + $0x18] sm:$0xf]
    %v3121 = vld [vmem:[#allocation11 + $0x1c] sm:$0xf]
    %v3122 = vld [vmem:[#allocation11 + $0x20] sm:$0xf]
    %v3123 = vld [vmem:[#allocation11 + $0x24] sm:$0xf]
    %v3124 = vld [vmem:[#allocation11 + $0x28] sm:$0xf]
    %v3125 = vld [vmem:[#allocation11 + $0x2c] sm:$0xf]
    %v3126 = vld [vmem:[#allocation11 + $0x30] sm:$0xf]
    %v3127 = vld [vmem:[#allocation11 + $0x34] sm:$0xf]
    %v3128 = vld [vmem:[#allocation11 + $0x38] sm:$0xf]
    %v3129 = vld [vmem:[#allocation11 + $0x3c] sm:$0xf]
    %v3130 = vld [vmem:[#allocation11 + $0x40] sm:$0xf]
    %v3131 = vld [vmem:[#allocation11 + $0x44] sm:$0xf]
    %v3132 = vld [vmem:[#allocation11 + $0x48] sm:$0xf]
    %v3133 = vld [vmem:[#allocation11 + $0x4c] sm:$0xf]
    %v3134 = vld [vmem:[#allocation11 + $0x50] sm:$0xf]
    %v3135 = vld [vmem:[#allocation11 + $0x54] sm:$0xf]
    %v3136 = vld [vmem:[#allocation11 + $0x58] sm:$0xf]
    %v3137 = vld [vmem:[#allocation11 + $0x5c] sm:$0xf]
    %v3138 = vld [vmem:[#allocation11 + $0x60] sm:$0xf]
    %v3139 = vld [vmem:[#allocation11 + $0x64] sm:$0xf]
    %v3140 = vld [vmem:[#allocation11 + $0x68] sm:$0xf]
    %v3141 = vld [vmem:[#allocation11 + $0x6c] sm:$0xf]
    %v3142 = vld [vmem:[#allocation11 + $0x70] sm:$0xf]
    %v3143 = vld [vmem:[#allocation11 + $0x74] sm:$0xf]
    %v3144 = vld [vmem:[#allocation11 + $0x78] sm:$0xf]
    %v3145 = vld [vmem:[#allocation11 + $0x7c] sm:$0xf]
    %v3146 = vld [vmem:[%s7] sm:$0x1]
    %v3148 = vperm.slane %v3146, 0
    %v3182 = vunpack.c.l.b16 %v3114
    %v3183 = vunpack.c.l.b16 %v3115
    %v3184 = vunpack.c.l.b16 %v3116
    %v3185 = vunpack.c.l.b16 %v3117
    %v3186 = vunpack.c.l.b16 %v3118
    %v3187 = vunpack.c.l.b16 %v3119
    %v3188 = vunpack.c.l.b16 %v3120
    %v3189 = vunpack.c.l.b16 %v3121
    %v3190 = vunpack.c.l.b16 %v3122
    %v3191 = vunpack.c.l.b16 %v3123
    %v3192 = vunpack.c.l.b16 %v3124
    %v3193 = vunpack.c.l.b16 %v3125
    %v3194 = vunpack.c.l.b16 %v3126
    %v3195 = vunpack.c.l.b16 %v3127
    %v3196 = vunpack.c.l.b16 %v3128
    %v3197 = vunpack.c.l.b16 %v3129
    %v3198 = vunpack.c.l.b16 %v3130
    %v3199 = vunpack.c.l.b16 %v3131
    %v3200 = vunpack.c.l.b16 %v3132
    %v3201 = vunpack.c.l.b16 %v3133
    %v3202 = vunpack.c.l.b16 %v3134
    %v3203 = vunpack.c.l.b16 %v3135
    %v3204 = vunpack.c.l.b16 %v3136
    %v3205 = vunpack.c.l.b16 %v3137
    %v3206 = vunpack.c.l.b16 %v3138
    %v3207 = vunpack.c.l.b16 %v3139
    %v3208 = vunpack.c.l.b16 %v3140
    %v3209 = vunpack.c.l.b16 %v3141
    %v3210 = vunpack.c.l.b16 %v3142
    %v3211 = vunpack.c.l.b16 %v3143
    %v3212 = vunpack.c.l.b16 %v3144
    %v3213 = vunpack.c.l.b16 %v3145
    %v3214 = vpack.c.b16 %v3183, %v3182
    %v3215 = vpack.c.b16 %v3185, %v3184
    %v3216 = vpack.c.b16 %v3187, %v3186
    %v3217 = vpack.c.b16 %v3189, %v3188
    %v3218 = vpack.c.b16 %v3191, %v3190
    %v3219 = vpack.c.b16 %v3193, %v3192
    %v3220 = vpack.c.b16 %v3195, %v3194
    %v3221 = vpack.c.b16 %v3197, %v3196
    %v3222 = vpack.c.b16 %v3199, %v3198
    %v3223 = vpack.c.b16 %v3201, %v3200
    %v3224 = vpack.c.b16 %v3203, %v3202
    %v3225 = vpack.c.b16 %v3205, %v3204
    %v3226 = vpack.c.b16 %v3207, %v3206
    %v3227 = vpack.c.b16 %v3209, %v3208
    %v3228 = vpack.c.b16 %v3211, %v3210
    %v3229 = vpack.c.b16 %v3213, %v3212
    %3246 = vmatpush.bf16.msra.mxu0 %v3221
    %3247 = vmatpush.bf16.msra.mxu0 %v3220
    %3248 = vmatpush.bf16.msra.mxu0 %v3219
    %3249 = vmatpush.bf16.msra.mxu0 %v3218
    %3250 = vmatpush.bf16.msra.mxu0 %v3217
    %3251 = vmatpush.bf16.msra.mxu0 %v3216
    %3252 = vmatpush.bf16.msra.mxu0 %v3215
    %3253 = vmatpush.bf16.msra.mxu0 %v3214
    %3254 = vmatmul.bf16.gmra.mxu0 %v3112
    %v3255 = vpop.f32.mrf.mxu0
    %v3256 = vadd.f32 %v3148, %v3255
    %v3257 = vpop.f32.mrf.mxu0
    %3258 = vdwg.mxu0
    %3259 = vmatpush.bf16.msra.mxu0 %v3229
    %3260 = vmatpush.bf16.msra.mxu0 %v3228
    %3261 = vmatpush.bf16.msra.mxu0 %v3227
    %3262 = vmatpush.bf16.msra.mxu0 %v3226
    %3263 = vmatpush.bf16.msra.mxu0 %v3225
    %3264 = vmatpush.bf16.msra.mxu0 %v3224
    %3265 = vmatpush.bf16.msra.mxu0 %v3223
    %3266 = vmatpush.bf16.msra.mxu0 %v3222
    %3267 = vmatmul.bf16.gmra.mxu0 %v3113
    %v3268 = vpop.f32.mrf.mxu0
    %v3269 = vadd.f32 %v3256, %v3268
    %v3270 = vpop.f32.mrf.mxu0
    %3271 = vdwg.mxu0
    %v3272 = vpack.c.bf16 %v3269, %v3269
    %3273 = vst [vmem:[#allocation13] sm:$0xf] %v3272
    // Predicated region
    $region58: #{tpu_custom_call.1} parent=1 // pred_check
      _
    $region59: #{tpu_custom_call.1} parent=1 // pred_check_branch
      %3275 = sbr.rel (0) target = $region61
    $region60: #{tpu_custom_call.1} parent=1 // pred_region
      %3277 = vsyncadd [#allocation4], 0
      %s3279 = sshll.u32 [#allocation13], 4
      %s3280 = int_to_ptr.vmem [resolvable:$true] %s3279
      %s3281 = sshll.u32 %s8, 4
      %s3282 = int_to_ptr.hbm [resolvable:$true] %s3281
      %3284 = dma.vmem_to_hbm [thread:$0]  %s3280, 64, %s3282, [#allocation4]
    $region61: #{tpu_custom_call.1} parent=1 // pred_fallthru
      _
    // Predicated region
    $region62: #{tpu_custom_call.1} parent=1 // pred_check
      _
    $region63: #{tpu_custom_call.1} parent=1 // pred_check_branch
      %3286 = sbr.rel (0) target = $region65
    $region64: #{tpu_custom_call.1} parent=1 // pred_region
      %3288 = dma.done [#allocation4], 64
    $region65: #{tpu_custom_call.1} parent=1 // pred_fallthru
      _
    %3289 = vsyncpa [#allocation3], 1
    %3290 = vsyncpa [#allocation6], 1
    %3291 = vsyncpa [#allocation9], 1
    %3292 = vsyncpa [#allocation12], 1
    %3293 = vsyncpa [#allocation4], 1

</llo_original>
